<compile_context>
chip_gen: v7x
topology: tpu7x:2x2x1
jax: 0.10.0
libtpu: 0.0.40
codegen_flags: <defaults>
</compile_context>

<pallas_src>
import functools

import numpy as np
import jax
import jax.numpy as jnp
from jax import lax
from jax.experimental import pallas as pl
from jax.experimental.pallas import tpu as pltpu

DECAY = 0.95
INPUT_FACTOR = 0.05
LN_EPS = 1e-5
DILATIONS = (1, 4, 16, 64)   # duration_pattern_convs dilations (k=3, "same" pad)
CONV_K = 4                   # Mamba depthwise causal conv kernel size (pad=3)
MAX_BBLK = 8                 # batch sequences fused per grid step


# --------------------------------------------------------------------------
# In-kernel helpers
# --------------------------------------------------------------------------
def _shift_rows(x, delta, tmod, T):
    """result row (b, t) = x[b, t + delta], zero outside [0, T).

    Operates on the batch-flattened [Bblk*T, C] layout: rolling the flat array
    only crosses sequence boundaries on rows that the per-sequence edge mask
    (tmod = t within its own sequence) zeroes anyway, so the result equals a
    per-sequence shift with zero padding.
    """
    if delta == 0:
        return x
    if abs(delta) >= T:
        return jnp.zeros_like(x)
    M = x.shape[0]
    if delta < 0:                                    # look back |delta| steps
        d = -delta
        mask = (tmod >= d).astype(x.dtype)
        return pltpu.roll(x, shift=d, axis=0) * mask
    mask = (tmod < (T - delta)).astype(x.dtype)      # look ahead delta steps
    return pltpu.roll(x, shift=M - delta, axis=0) * mask


def _make_regulator_kernel(deltas):
    """deltas: static tuple of pattern-conv shift offsets (all |delta| < T)."""

    def kernel(text_ref, film_ref, ipw_ref, inxw_ref, ingw_ref, vinner_ref,
               bw_ref, cw_ref, outw_ref, vh_ref, L_ref, fuseall_ref,
               bbw_ref, headw_ref, o_ref):
        bblk, T, text_dim = text_ref.shape
        M = bblk * T
        bf = jnp.bfloat16

        # Time index of each flattened row within its own sequence.
        tmod = lax.broadcasted_iota(jnp.int32, (bblk, T, 1), 1).reshape(M, 1)

        # FiLM modulation (scale only, matching the reference) + input_proj.
        modulated = (text_ref[...] * (1.0 + film_ref[...])).reshape(M, text_dim)
        x = jnp.dot(modulated.astype(bf), ipw_ref[...],
                    preferred_element_type=jnp.float32)             # [M, H]
        x16 = x.astype(bf)

        # ---------------- InfiniteMambaCore ----------------
        x_in = jnp.dot(x16, inxw_ref[...], preferred_element_type=jnp.float32)
        x_gate = jnp.dot(x16, ingw_ref[...], preferred_element_type=jnp.float32)

        # Causal depthwise Conv1d(kernel=4, padding=3)[:, :, :T] via rolls.
        conv = x_in * vinner_ref[CONV_K - 1][None, :] + vinner_ref[CONV_K][None, :]
        for k in range(CONV_K - 1):
            back = CONV_K - 1 - k                    # tap k looks `back` steps back
            conv = conv + _shift_rows(x_in, -back, tmod, T) * vinner_ref[k][None, :]
        u = conv * jax.nn.sigmoid(conv)              # SiLU, [M, inner] f32

        # h_t = 0.95 h_{t-1} + 0.05 B_proj(u_t), h_{-1}=0: one bf16 MXU matmul
        # with the precomputed block-diagonal lower-triangular decay matrix.
        up = jnp.dot(u.astype(bf), bw_ref[...], preferred_element_type=jnp.float32)
        h = jnp.dot(L_ref[...], up.astype(bf), preferred_element_type=jnp.float32)
        y = jnp.dot(h.astype(bf), cw_ref[...], preferred_element_type=jnp.float32)
        y = y + vinner_ref[CONV_K + 1][None, :] * u              # + D * u
        y = y * (x_gate * jax.nn.sigmoid(x_gate))                # SiLU gate
        y = jnp.dot(y.astype(bf), outw_ref[...], preferred_element_type=jnp.float32)

        r = y + x                                                # residual + LN
        mean = jnp.mean(r, axis=-1, keepdims=True)
        var = jnp.mean((r - mean) ** 2, axis=-1, keepdims=True)
        feats = (r - mean) * lax.rsqrt(var + LN_EPS)
        feats = feats * vh_ref[0][None, :] + vh_ref[1][None, :]

        # ---- duration_fusion: feature half + folded dilated-pattern half ----
        # Single deep-K matmul: concat [feats | shifted x copies] along lanes
        # against the pre-folded [(1+n_delta)*H, H] fusion weight.
        parts = [feats.astype(bf)]
        for delta in deltas:
            parts.append(_shift_rows(x, delta, tmod, T).astype(bf))
        fused = jnp.dot(jnp.concatenate(parts, axis=-1), fuseall_ref[...],
                        preferred_element_type=jnp.float32)         # [M, H]
        fused = jnp.maximum(fused, 0.0)                             # ReLU
        mean = jnp.mean(fused, axis=-1, keepdims=True)
        var = jnp.mean((fused - mean) ** 2, axis=-1, keepdims=True)
        fused = (fused - mean) * lax.rsqrt(var + LN_EPS)
        fused = fused * vh_ref[2][None, :] + vh_ref[3][None, :]

        # ---- shared backbone + duration / confidence heads ----
        # TODO(synk): nn.Dropout(0.1) is eval-mode identity here.
        shared = jnp.dot(fused.astype(bf), bbw_ref[...],
                         preferred_element_type=jnp.float32)
        shared = jnp.maximum(shared, 0.0)                           # ReLU
        z = jnp.dot(shared.astype(bf), headw_ref[...],
                    preferred_element_type=jnp.float32)             # [M, 2]
        softplus = jnp.maximum(z, 0.0) + jnp.log1p(jnp.exp(-jnp.abs(z)))
        sigm = jax.nn.sigmoid(z)
        col = lax.broadcasted_iota(jnp.int32, z.shape, 1)
        # TODO(synk): last-dim=2 output is a masked store; only worth making
        # lane-dense (e.g. [B, 2, T]) once T * Bblk is large.
        o_ref[...] = jnp.where(col == 0, softplus, sigm).reshape(bblk, T, 2)

    return kernel


# --------------------------------------------------------------------------
# pallas_call wrapper
# --------------------------------------------------------------------------
def _full_spec(shape):
    return pl.BlockSpec(shape, lambda g: (0,) * len(shape))


def _vmem_limit_bytes():
    # v5e/v6e: 128 MiB physical -> allow 64 MiB scoped; v7x: 64 MiB -> 32 MiB.
    try:
        cap = int(pltpu.get_tpu_info().vmem_capacity_bytes)
    except Exception:
        cap = 64 * 1024 * 1024
    return int(min(cap // 2, 64 * 1024 * 1024))


def _regulator_pallas(kp, text_features, film, Lbig, fuse_all, deltas, bblk):
    B, T, text_dim = text_features.shape
    H = kp["ip_w"].shape[1]
    inner = kp["in_w_x"].shape[1]
    S = kp["b_w"].shape[1]
    Hh = kp["bb_w"].shape[1]
    M = bblk * T

    return pl.pallas_call(
        _make_regulator_kernel(deltas),
        out_shape=jax.ShapeDtypeStruct((B, T, 2), jnp.float32),
        grid=(B // bblk,),
        in_specs=[
            pl.BlockSpec((bblk, T, text_dim), lambda g: (g, 0, 0)),  # text
            pl.BlockSpec((bblk, 1, text_dim), lambda g: (g, 0, 0)),  # FiLM vec
            _full_spec((text_dim, H)),          # input_proj.T          (bf16)
            _full_spec((H, inner)),             # in_proj x-half.T      (bf16)
            _full_spec((H, inner)),             # in_proj gate-half.T   (bf16)
            _full_spec((CONV_K + 2, inner)),    # conv taps | bias | D  (f32)
            _full_spec((inner, S)),             # B_proj.T              (bf16)
            _full_spec((S, inner)),             # C_proj.T              (bf16)
            _full_spec((inner, H)),             # out_proj.T            (bf16)
            _full_spec((4, H)),                 # mamba/fusion LN g,b   (f32)
            _full_spec((M, M)),                 # block-diag decay L    (bf16)
            _full_spec(fuse_all.shape),         # fused fusion weight   (bf16)
            _full_spec((H, Hh)),                # shared backbone W.T   (bf16)
            _full_spec((Hh, 2)),                # [duration|confidence] (bf16)
        ],
        out_specs=pl.BlockSpec((bblk, T, 2), lambda g: (g, 0, 0)),
        compiler_params=pltpu.CompilerParams(
            dimension_semantics=("parallel",),      # batch blocks across TCs
            vmem_limit_bytes=_vmem_limit_bytes()),
    )(text_features, film, kp["ip_w"], kp["in_w_x"], kp["in_w_g"],
      kp["vec_inner"], kp["b_w"], kp["c_w"], kp["out_w"], kp["vec_h"],
      Lbig, fuse_all, kp["bb_w"], kp["head_w"])


def _decay_block_diag(T, bblk):
    # L[t, s] = 0.05 * 0.95**(t-s) for s <= t else 0, replicated block-
    # diagonally per sequence so the whole recurrence of a batch block is one
    # bf16 MXU matmul on the flattened [bblk*T, .] activations.
    # TODO(synk): for large T, chunk the recurrence (blocked lower-triangular
    # L per T-chunk + decayed carry) so VMEM stays O(T*chunk), not O((bblk*T)^2).
    t = np.arange(T)
    diff = t[:, None] - t[None, :]
    L = np.where(diff >= 0,
                 INPUT_FACTOR * np.power(DECAY, np.maximum(diff, 0)), 0.0)
    big = np.kron(np.eye(bblk), L).astype(np.float32)
    return jnp.asarray(big).astype(jnp.bfloat16)


def _pick_bblk(B):
    """Largest divisor of B <= MAX_BBLK (raises MXU M from T to bblk*T); if
    that collapses the batch into a single grid step, fall back to the largest
    divisor giving >= 2 steps so both v7x TensorCores get work."""
    divisors = [d for d in range(1, min(B, MAX_BBLK) + 1) if B % d == 0]
    bblk = max(divisors)
    if B > 1 and B // bblk < 2:
        bblk = max(d for d in divisors if B // d >= 2)
    return bblk


# --------------------------------------------------------------------------
# Parameters (synthetic, deterministic) and weight pre-folding
# --------------------------------------------------------------------------
def prepare_params(tw, tokens_per_second):
    """Convert PyTorch-layout weights to kernel layout + fold pattern path."""
    H = tw["input_proj_w"].shape[0]
    inner = tw["m_conv_b"].shape[0]
    Dq = H // 4
    bf = jnp.bfloat16

    conv_w = tw["m_conv_w"][:, 0, :].T                                # [K, inner]
    vec_inner = jnp.concatenate(
        [conv_w, tw["m_conv_b"][None, :], tw["m_D"][None, :]],
        axis=0).astype(jnp.float32)                                   # [K+2, inner]
    vec_h = jnp.stack([tw["m_ln_g"], tw["m_ln_b"],
                       tw["f_ln_g"], tw["f_ln_b"]]).astype(jnp.float32)  # [4, H]

    kp = {
        "ip_w": tw["input_proj_w"].T.astype(bf),                      # [text, H]
        "in_w_x": tw["m_in_w"][:inner].T.astype(bf),                  # [H, inner]
        "in_w_g": tw["m_in_w"][inner:].T.astype(bf),                  # [H, inner]
        "vec_inner": vec_inner,
        "b_w": tw["m_B_w"].T.astype(bf),                              # [inner, S]
        "c_w": tw["m_C_w"].T.astype(bf),                              # [S, inner]
        "out_w": tw["m_out_w"].T.astype(bf),                          # [inner, H]
        "vec_h": vec_h,
        "bb_w": tw["bb_w"].T.astype(bf),                              # [H, H//2]
        "head_w": jnp.concatenate([tw["dur_w"].T, tw["conf_w"].T],
                                  axis=1).astype(bf),                 # [H//2, 2]
    }

    # Fold each dilated-conv tap (bias=False in the reference) through its
    # Dq-wide slice of the fusion weight into one dense [H, H] matrix per
    # shift offset (grouped by delta).
    pat_mats = {}
    for i, dil in enumerate(DILATIONS):
        w_pat_i = tw["fuse_w"][:, H + i * Dq: H + (i + 1) * Dq]       # [H, Dq]
        for k in range(3):
            delta = (k - 1) * dil
            m = tw["pconv_w"][i][:, :, k].T @ w_pat_i.T               # [H, H]
            pat_mats[delta] = pat_mats.get(delta, 0.0) + m
    pat_mats = {d: jnp.asarray(m, jnp.float32) for d, m in pat_mats.items()}

    return {
        "kernel": kp,
        "fuse_w_feat": jnp.asarray(tw["fuse_w"][:, :H].T, jnp.float32),  # [H, H]
        "pat_mats": pat_mats,
        "film_w1_t": tw["film_w1"].T.astype(jnp.float32),             # [style, H]
        "film_w2_t": tw["film_w2"].T.astype(jnp.float32),             # [H, text]
        "tokens_per_second": tokens_per_second,
        "_cache": {},                     # per-(T, bblk) decay L / fused weight
    }


def init_params(key, text_dim=128, style_dim=64, hidden_dim=128, state_size=64,
                tokens_per_second=75.0):
    H, S = hidden_dim, state_size
    inner = 2 * H
    Dq = H // 4
    keys = iter(jax.random.split(key, 32))

    def nrm(shape, scale=0.02):
        return (scale * jax.random.normal(next(keys), shape)).astype(jnp.float32)

    torch_like = {                                   # PyTorch [out, in] layout
        "film_w1": nrm((H, style_dim)),
        "film_w2": nrm((text_dim, H)),
        "input_proj_w": nrm((H, text_dim)),
        "m_in_w": nrm((2 * inner, H)),
        "m_conv_w": nrm((inner, 1, CONV_K)),
        "m_conv_b": nrm((inner,)),
        "m_B_w": nrm((S, inner)),
        "m_C_w": nrm((inner, S)),
        "m_D": nrm((inner,)),
        "m_out_w": nrm((H, inner)),
        "m_ln_g": jnp.ones((H,), jnp.float32),
        "m_ln_b": jnp.zeros((H,), jnp.float32),
        "pconv_w": [nrm((Dq, H, 3)) for _ in DILATIONS],
        "fuse_w": nrm((H, 2 * H)),
        "f_ln_g": jnp.ones((H,), jnp.float32),
        "f_ln_b": jnp.zeros((H,), jnp.float32),
        "bb_w": nrm((H // 2, H)),
        "dur_w": nrm((1, H // 2)),
        "conf_w": nrm((1, H // 2)),
    }
    return prepare_params(torch_like, tokens_per_second)


# --------------------------------------------------------------------------
# Forward
# --------------------------------------------------------------------------
def _get_static(params, T, bblk):
    """Cache the decay matrix and fused fusion weight per (T, bblk)."""
    key = (T, bblk)
    cached = params["_cache"].get(key)
    if cached is None:
        deltas = tuple(d for d in sorted(params["pat_mats"]) if abs(d) < T)
        fuse_all = jnp.concatenate(
            [params["fuse_w_feat"]] + [params["pat_mats"][d] for d in deltas],
            axis=0).astype(jnp.bfloat16)                 # [(1+n_delta)*H, H]
        Lbig = _decay_block_diag(T, bblk)                # bf16 [bblk*T, bblk*T]
        cached = (deltas, fuse_all, Lbig)
        params["_cache"][key] = cached
    return cached


@functools.partial(jax.jit, static_argnames=("deltas", "bblk"))
def _forward_jit(kp, film_w1_t, film_w2_t, Lbig, fuse_all,
                 text_features, style_embedding, *, deltas, bblk):
    # FiLM conditioning (style_to_film): tiny matmuls fused with the
    # pallas_call dispatch under one jit (no eager per-call glue).
    film = jnp.maximum(style_embedding @ film_w1_t, 0.0)
    film = (film @ film_w2_t)[:, None, :]                # [B, 1, text_dim]
    return _regulator_pallas(kp, text_features, film, Lbig, fuse_all,
                             deltas, bblk)


def _regulate_length_infinite(text_features, duration_tokens):
    # TODO(synk): data-dependent repeat_interleave with dynamic output length
    # (ragged per batch) has no static-shape Pallas equivalent; done on host.
    tf = np.asarray(text_features)
    dt = np.asarray(duration_tokens)
    B, T, D = tf.shape
    expanded = [np.repeat(tf[b], dt[b], axis=0) for b in range(B)]
    max_len = max(int(e.shape[0]) for e in expanded)
    out = np.zeros((B, max_len, D), dtype=tf.dtype)
    for b, e in enumerate(expanded):
        out[b, : e.shape[0]] = e
    return jnp.asarray(out)


def infinite_duration_regulator(params, text_features, style_embedding):
    """text_features: [B, T, text_dim], style_embedding: [B, style_dim]."""
    B, T, _ = text_features.shape
    bblk = _pick_bblk(B)
    # TODO(synk): fresh-batch semantics (continuous_state reset to zeros);
    # carrying h across separate forward calls is not modeled.
    deltas, fuse_all, Lbig = _get_static(params, T, bblk)

    out = _forward_jit(params["kernel"], params["film_w1_t"],
                       params["film_w2_t"], Lbig, fuse_all,
                       text_features, style_embedding,
                       deltas=deltas, bblk=bblk)         # [B, T, 2]
    predicted_durations = out[..., 0]
    confidence = out[..., 1]
    duration_tokens = jnp.clip(
        jnp.round(predicted_durations * params["tokens_per_second"]),
        1, 10).astype(jnp.int32)

    regulated = _regulate_length_infinite(text_features, duration_tokens)
    return regulated, predicted_durations, duration_tokens, confidence


if __name__ == "__main__":
    text_dim, style_dim, hidden_dim, state_size = 128, 64, 128, 64
    B, T = 2, 16

    key = jax.random.PRNGKey(0)
    kparams, ktext, kstyle = jax.random.split(key, 3)
    params = init_params(kparams, text_dim, style_dim, hidden_dim, state_size)
    text_features = jax.random.normal(ktext, (B, T, text_dim), dtype=jnp.float32)
    style_embedding = jax.random.normal(kstyle, (B, style_dim), dtype=jnp.float32)

    regulated, durations, tokens, confidence = infinite_duration_regulator(
        params, text_features, style_embedding)
    jax.block_until_ready((regulated, durations, tokens, confidence))

    assert durations.shape == (B, T), durations.shape
    assert confidence.shape == (B, T), confidence.shape
    assert tokens.shape == (B, T) and tokens.dtype == jnp.int32
    assert regulated.ndim == 3 and regulated.shape[0] == B
    assert regulated.shape[2] == text_dim
    assert bool(jnp.all(tokens >= 1)) and bool(jnp.all(tokens <= 10))
    assert bool(jnp.all(confidence >= 0.0)) and bool(jnp.all(confidence <= 1.0))
    print("KERNEL_OK")
</pallas_src>

<mosaic_0001>
module attributes {stable_mosaic.version = 11 : i64} {
  func.func @kernel(%arg0: i32, %arg1: memref<1x16x128xf32, #tpu.memory_space<vmem>>, %arg2: memref<1x1x128xf32, #tpu.memory_space<vmem>>, %arg3: memref<128x128xbf16, #tpu.memory_space<vmem>>, %arg4: memref<128x256xbf16, #tpu.memory_space<vmem>>, %arg5: memref<128x256xbf16, #tpu.memory_space<vmem>>, %arg6: memref<6x256xf32, #tpu.memory_space<vmem>>, %arg7: memref<256x64xbf16, #tpu.memory_space<vmem>>, %arg8: memref<64x256xbf16, #tpu.memory_space<vmem>>, %arg9: memref<256x128xbf16, #tpu.memory_space<vmem>>, %arg10: memref<4x128xf32, #tpu.memory_space<vmem>>, %arg11: memref<16x16xbf16, #tpu.memory_space<vmem>>, %arg12: memref<768x128xbf16, #tpu.memory_space<vmem>>, %arg13: memref<128x64xbf16, #tpu.memory_space<vmem>>, %arg14: memref<64x2xbf16, #tpu.memory_space<vmem>>, %arg15: memref<1x16x2xf32, #tpu.memory_space<vmem>>) attributes {dimension_semantics = [#tpu.dimension_semantics<parallel>], iteration_bounds = array<i64: 2>, scalar_prefetch = 0 : i64, scratch_operands = 0 : i64, tpu.core_type = #tpu.core_type<tc>, window_params = [{transform_indices = @transform_0, window_bounds = array<i64: 1, 16, 128>}, {transform_indices = @transform_1, window_bounds = array<i64: 1, 1, 128>}, {pipeline_mode = #tpu.pipeline_mode<synchronous>, transform_indices = @transform_2, window_bounds = array<i64: 128, 128>}, {pipeline_mode = #tpu.pipeline_mode<synchronous>, transform_indices = @transform_3, window_bounds = array<i64: 128, 256>}, {pipeline_mode = #tpu.pipeline_mode<synchronous>, transform_indices = @transform_4, window_bounds = array<i64: 128, 256>}, {pipeline_mode = #tpu.pipeline_mode<synchronous>, transform_indices = @transform_5, window_bounds = array<i64: 6, 256>}, {pipeline_mode = #tpu.pipeline_mode<synchronous>, transform_indices = @transform_6, window_bounds = array<i64: 256, 64>}, {pipeline_mode = #tpu.pipeline_mode<synchronous>, transform_indices = @transform_7, window_bounds = array<i64: 64, 256>}, {pipeline_mode = #tpu.pipeline_mode<synchronous>, transform_indices = @transform_8, window_bounds = array<i64: 256, 128>}, {pipeline_mode = #tpu.pipeline_mode<synchronous>, transform_indices = @transform_9, window_bounds = array<i64: 4, 128>}, {pipeline_mode = #tpu.pipeline_mode<synchronous>, transform_indices = @transform_10, window_bounds = array<i64: 16, 16>}, {pipeline_mode = #tpu.pipeline_mode<synchronous>, transform_indices = @transform_11, window_bounds = array<i64: 768, 128>}, {pipeline_mode = #tpu.pipeline_mode<synchronous>, transform_indices = @transform_12, window_bounds = array<i64: 128, 64>}, {pipeline_mode = #tpu.pipeline_mode<synchronous>, transform_indices = @transform_13, window_bounds = array<i64: 64, 2>}, {transform_indices = @transform_14, window_bounds = array<i64: 1, 16, 2>}]} {
    %0 = tpu.iota {dimensions = array<i32: 1>} : vector<1x16x1xi32>
    %1 = vector.shape_cast %0 : vector<1x16x1xi32> to vector<16x1xi32>
    %c0 = arith.constant 0 : index
    %c0_0 = arith.constant 0 : index
    %c0_1 = arith.constant 0 : index
    %2 = vector.load %arg1[%c0, %c0_0, %c0_1] : memref<1x16x128xf32, #tpu.memory_space<vmem>>, vector<1x16x128xf32>
    %c0_2 = arith.constant 0 : index
    %c0_3 = arith.constant 0 : index
    %c0_4 = arith.constant 0 : index
    %3 = vector.load %arg2[%c0_2, %c0_3, %c0_4] : memref<1x1x128xf32, #tpu.memory_space<vmem>>, vector<1x1x128xf32>
    %cst = arith.constant 1.000000e+00 : f32
    %4 = vector.broadcast %cst : f32 to vector<1x1x128xf32>
    %5 = arith.addf %4, %3 : vector<1x1x128xf32>
    %6 = vector.broadcast %5 : vector<1x1x128xf32> to vector<1x16x128xf32>
    %7 = arith.mulf %2, %6 : vector<1x16x128xf32>
    %8 = vector.shape_cast %7 : vector<1x16x128xf32> to vector<16x128xf32>
    %9 = arith.truncf %8 : vector<16x128xf32> to vector<16x128xbf16>
    %c0_5 = arith.constant 0 : index
    %c0_6 = arith.constant 0 : index
    %10 = vector.load %arg3[%c0_5, %c0_6] : memref<128x128xbf16, #tpu.memory_space<vmem>>, vector<128x128xbf16>
    %cst_7 = arith.constant dense<0.000000e+00> : vector<16x128xf32>
    %11 = tpu.matmul %9, %10, %cst_7 {dimension_numbers = #tpu.dot_dimension_numbers<[1], [0], [0], [1], [0, 0, 1, 1], [], []>} : vector<16x128xbf16>, vector<128x128xbf16>, vector<16x128xf32> -> vector<16x128xf32>
    %12 = arith.truncf %11 : vector<16x128xf32> to vector<16x128xbf16>
    %c0_8 = arith.constant 0 : index
    %c0_9 = arith.constant 0 : index
    %13 = vector.load %arg4[%c0_8, %c0_9] : memref<128x256xbf16, #tpu.memory_space<vmem>>, vector<128x256xbf16>
    %cst_10 = arith.constant dense<0.000000e+00> : vector<16x256xf32>
    %14 = tpu.matmul %12, %13, %cst_10 {dimension_numbers = #tpu.dot_dimension_numbers<[1], [0], [0], [1], [0, 0, 1, 1], [], []>} : vector<16x128xbf16>, vector<128x256xbf16>, vector<16x256xf32> -> vector<16x256xf32>
    %c0_11 = arith.constant 0 : index
    %c0_12 = arith.constant 0 : index
    %15 = vector.load %arg5[%c0_11, %c0_12] : memref<128x256xbf16, #tpu.memory_space<vmem>>, vector<128x256xbf16>
    %cst_13 = arith.constant dense<0.000000e+00> : vector<16x256xf32>
    %16 = tpu.matmul %12, %15, %cst_13 {dimension_numbers = #tpu.dot_dimension_numbers<[1], [0], [0], [1], [0, 0, 1, 1], [], []>} : vector<16x128xbf16>, vector<128x256xbf16>, vector<16x256xf32> -> vector<16x256xf32>
    %c3 = arith.constant 3 : index
    %c0_14 = arith.constant 0 : index
    %17 = vector.load %arg6[%c3, %c0_14] : memref<6x256xf32, #tpu.memory_space<vmem>>, vector<1x256xf32>
    %18 = vector.shape_cast %17 : vector<1x256xf32> to vector<256xf32>
    %19 = vector.shape_cast %18 : vector<256xf32> to vector<1x256xf32>
    %20 = vector.broadcast %19 : vector<1x256xf32> to vector<16x256xf32>
    %21 = arith.mulf %14, %20 : vector<16x256xf32>
    %c4 = arith.constant 4 : index
    %c0_15 = arith.constant 0 : index
    %22 = vector.load %arg6[%c4, %c0_15] : memref<6x256xf32, #tpu.memory_space<vmem>>, vector<1x256xf32>
    %23 = vector.shape_cast %22 : vector<1x256xf32> to vector<256xf32>
    %24 = vector.shape_cast %23 : vector<256xf32> to vector<1x256xf32>
    %25 = vector.broadcast %24 : vector<1x256xf32> to vector<16x256xf32>
    %26 = arith.addf %21, %25 : vector<16x256xf32>
    %c3_i32 = arith.constant 3 : i32
    %27 = vector.broadcast %c3_i32 : i32 to vector<16x1xi32>
    %28 = arith.cmpi sge, %1, %27 : vector<16x1xi32>
    %29 = arith.extui %28 : vector<16x1xi1> to vector<16x1xi32>
    %30 = arith.sitofp %29 : vector<16x1xi32> to vector<16x1xf32>
    %c3_i32_16 = arith.constant 3 : i32
    %31 = tpu.dynamic_rotate %14 by %c3_i32_16 dim 0 : vector<16x256xf32>, i32 -> vector<16x256xf32>
    %32 = vector.broadcast %30 : vector<16x1xf32> to vector<16x256xf32>
    %33 = arith.mulf %31, %32 : vector<16x256xf32>
    %c0_17 = arith.constant 0 : index
    %c0_18 = arith.constant 0 : index
    %34 = vector.load %arg6[%c0_17, %c0_18] : memref<6x256xf32, #tpu.memory_space<vmem>>, vector<1x256xf32>
    %35 = vector.shape_cast %34 : vector<1x256xf32> to vector<256xf32>
    %36 = vector.shape_cast %35 : vector<256xf32> to vector<1x256xf32>
    %37 = vector.broadcast %36 : vector<1x256xf32> to vector<16x256xf32>
    %38 = arith.mulf %33, %37 : vector<16x256xf32>
    %39 = arith.addf %26, %38 : vector<16x256xf32>
    %c2_i32 = arith.constant 2 : i32
    %40 = vector.broadcast %c2_i32 : i32 to vector<16x1xi32>
    %41 = arith.cmpi sge, %1, %40 : vector<16x1xi32>
    %42 = arith.extui %41 : vector<16x1xi1> to vector<16x1xi32>
    %43 = arith.sitofp %42 : vector<16x1xi32> to vector<16x1xf32>
    %c2_i32_19 = arith.constant 2 : i32
    %44 = tpu.dynamic_rotate %14 by %c2_i32_19 dim 0 : vector<16x256xf32>, i32 -> vector<16x256xf32>
    %45 = vector.broadcast %43 : vector<16x1xf32> to vector<16x256xf32>
    %46 = arith.mulf %44, %45 : vector<16x256xf32>
    %c1 = arith.constant 1 : index
    %c0_20 = arith.constant 0 : index
    %47 = vector.load %arg6[%c1, %c0_20] : memref<6x256xf32, #tpu.memory_space<vmem>>, vector<1x256xf32>
    %48 = vector.shape_cast %47 : vector<1x256xf32> to vector<256xf32>
    %49 = vector.shape_cast %48 : vector<256xf32> to vector<1x256xf32>
    %50 = vector.broadcast %49 : vector<1x256xf32> to vector<16x256xf32>
    %51 = arith.mulf %46, %50 : vector<16x256xf32>
    %52 = arith.addf %39, %51 : vector<16x256xf32>
    %c1_i32 = arith.constant 1 : i32
    %53 = vector.broadcast %c1_i32 : i32 to vector<16x1xi32>
    %54 = arith.cmpi sge, %1, %53 : vector<16x1xi32>
    %55 = arith.extui %54 : vector<16x1xi1> to vector<16x1xi32>
    %56 = arith.sitofp %55 : vector<16x1xi32> to vector<16x1xf32>
    %c1_i32_21 = arith.constant 1 : i32
    %57 = tpu.dynamic_rotate %14 by %c1_i32_21 dim 0 : vector<16x256xf32>, i32 -> vector<16x256xf32>
    %58 = vector.broadcast %56 : vector<16x1xf32> to vector<16x256xf32>
    %59 = arith.mulf %57, %58 : vector<16x256xf32>
    %c2 = arith.constant 2 : index
    %c0_22 = arith.constant 0 : index
    %60 = vector.load %arg6[%c2, %c0_22] : memref<6x256xf32, #tpu.memory_space<vmem>>, vector<1x256xf32>
    %61 = vector.shape_cast %60 : vector<1x256xf32> to vector<256xf32>
    %62 = vector.shape_cast %61 : vector<256xf32> to vector<1x256xf32>
    %63 = vector.broadcast %62 : vector<1x256xf32> to vector<16x256xf32>
    %64 = arith.mulf %59, %63 : vector<16x256xf32>
    %65 = arith.addf %52, %64 : vector<16x256xf32>
    %66 = arith.negf %65 : vector<16x256xf32>
    %67 = math.exp %66 : vector<16x256xf32>
    %cst_23 = arith.constant 1.000000e+00 : f32
    %68 = vector.broadcast %cst_23 : f32 to vector<16x256xf32>
    %69 = arith.addf %68, %67 : vector<16x256xf32>
    %70 = arith.divf %68, %69 : vector<16x256xf32>
    %71 = arith.mulf %65, %70 : vector<16x256xf32>
    %72 = arith.truncf %71 : vector<16x256xf32> to vector<16x256xbf16>
    %c0_24 = arith.constant 0 : index
    %c0_25 = arith.constant 0 : index
    %73 = vector.load %arg7[%c0_24, %c0_25] : memref<256x64xbf16, #tpu.memory_space<vmem>>, vector<256x64xbf16>
    %cst_26 = arith.constant dense<0.000000e+00> : vector<16x64xf32>
    %74 = tpu.matmul %72, %73, %cst_26 {dimension_numbers = #tpu.dot_dimension_numbers<[1], [0], [0], [1], [0, 0, 1, 1], [], []>} : vector<16x256xbf16>, vector<256x64xbf16>, vector<16x64xf32> -> vector<16x64xf32>
    %c0_27 = arith.constant 0 : index
    %c0_28 = arith.constant 0 : index
    %75 = vector.load %arg11[%c0_27, %c0_28] : memref<16x16xbf16, #tpu.memory_space<vmem>>, vector<16x16xbf16>
    %76 = arith.truncf %74 : vector<16x64xf32> to vector<16x64xbf16>
    %cst_29 = arith.constant dense<0.000000e+00> : vector<16x64xf32>
    %77 = tpu.matmul %75, %76, %cst_29 {dimension_numbers = #tpu.dot_dimension_numbers<[1], [0], [0], [1], [0, 0, 1, 1], [], []>} : vector<16x16xbf16>, vector<16x64xbf16>, vector<16x64xf32> -> vector<16x64xf32>
    %78 = arith.truncf %77 : vector<16x64xf32> to vector<16x64xbf16>
    %c0_30 = arith.constant 0 : index
    %c0_31 = arith.constant 0 : index
    %79 = vector.load %arg8[%c0_30, %c0_31] : memref<64x256xbf16, #tpu.memory_space<vmem>>, vector<64x256xbf16>
    %cst_32 = arith.constant dense<0.000000e+00> : vector<16x256xf32>
    %80 = tpu.matmul %78, %79, %cst_32 {dimension_numbers = #tpu.dot_dimension_numbers<[1], [0], [0], [1], [0, 0, 1, 1], [], []>} : vector<16x64xbf16>, vector<64x256xbf16>, vector<16x256xf32> -> vector<16x256xf32>
    %c5 = arith.constant 5 : index
    %c0_33 = arith.constant 0 : index
    %81 = vector.load %arg6[%c5, %c0_33] : memref<6x256xf32, #tpu.memory_space<vmem>>, vector<1x256xf32>
    %82 = vector.shape_cast %81 : vector<1x256xf32> to vector<256xf32>
    %83 = vector.shape_cast %82 : vector<256xf32> to vector<1x256xf32>
    %84 = vector.broadcast %83 : vector<1x256xf32> to vector<16x256xf32>
    %85 = arith.mulf %84, %71 : vector<16x256xf32>
    %86 = arith.addf %80, %85 : vector<16x256xf32>
    %87 = arith.negf %16 : vector<16x256xf32>
    %88 = math.exp %87 : vector<16x256xf32>
    %cst_34 = arith.constant 1.000000e+00 : f32
    %89 = vector.broadcast %cst_34 : f32 to vector<16x256xf32>
    %90 = arith.addf %89, %88 : vector<16x256xf32>
    %91 = arith.divf %89, %90 : vector<16x256xf32>
    %92 = arith.mulf %16, %91 : vector<16x256xf32>
    %93 = arith.mulf %86, %92 : vector<16x256xf32>
    %94 = arith.truncf %93 : vector<16x256xf32> to vector<16x256xbf16>
    %c0_35 = arith.constant 0 : index
    %c0_36 = arith.constant 0 : index
    %95 = vector.load %arg9[%c0_35, %c0_36] : memref<256x128xbf16, #tpu.memory_space<vmem>>, vector<256x128xbf16>
    %cst_37 = arith.constant dense<0.000000e+00> : vector<16x128xf32>
    %96 = tpu.matmul %94, %95, %cst_37 {dimension_numbers = #tpu.dot_dimension_numbers<[1], [0], [0], [1], [0, 0, 1, 1], [], []>} : vector<16x256xbf16>, vector<256x128xbf16>, vector<16x128xf32> -> vector<16x128xf32>
    %97 = arith.addf %96, %11 : vector<16x128xf32>
    %cst_38 = arith.constant dense<0.000000e+00> : vector<16xf32>
    %98 = vector.multi_reduction <add>, %97, %cst_38 [1] : vector<16x128xf32> to vector<16xf32>
    %99 = vector.shape_cast %98 : vector<16xf32> to vector<16x1xf32>
    %cst_39 = arith.constant 1.280000e+02 : f32
    %100 = vector.broadcast %cst_39 : f32 to vector<16x1xf32>
    %101 = arith.divf %99, %100 : vector<16x1xf32>
    %102 = vector.broadcast %101 : vector<16x1xf32> to vector<16x128xf32>
    %103 = arith.subf %97, %102 : vector<16x128xf32>
    %104 = arith.mulf %103, %103 : vector<16x128xf32>
    %cst_40 = arith.constant dense<0.000000e+00> : vector<16xf32>
    %105 = vector.multi_reduction <add>, %104, %cst_40 [1] : vector<16x128xf32> to vector<16xf32>
    %106 = vector.shape_cast %105 : vector<16xf32> to vector<16x1xf32>
    %cst_41 = arith.constant 1.280000e+02 : f32
    %107 = vector.broadcast %cst_41 : f32 to vector<16x1xf32>
    %108 = arith.divf %106, %107 : vector<16x1xf32>
    %109 = vector.broadcast %101 : vector<16x1xf32> to vector<16x128xf32>
    %110 = arith.subf %97, %109 : vector<16x128xf32>
    %cst_42 = arith.constant 9.99999974E-6 : f32
    %111 = vector.broadcast %cst_42 : f32 to vector<16x1xf32>
    %112 = arith.addf %108, %111 : vector<16x1xf32>
    %113 = math.rsqrt %112 : vector<16x1xf32>
    %114 = vector.broadcast %113 : vector<16x1xf32> to vector<16x128xf32>
    %115 = arith.mulf %110, %114 : vector<16x128xf32>
    %c0_43 = arith.constant 0 : index
    %c0_44 = arith.constant 0 : index
    %116 = vector.load %arg10[%c0_43, %c0_44] : memref<4x128xf32, #tpu.memory_space<vmem>>, vector<1x128xf32>
    %117 = vector.shape_cast %116 : vector<1x128xf32> to vector<128xf32>
    %118 = vector.shape_cast %117 : vector<128xf32> to vector<1x128xf32>
    %119 = vector.broadcast %118 : vector<1x128xf32> to vector<16x128xf32>
    %120 = arith.mulf %115, %119 : vector<16x128xf32>
    %c1_45 = arith.constant 1 : index
    %c0_46 = arith.constant 0 : index
    %121 = vector.load %arg10[%c1_45, %c0_46] : memref<4x128xf32, #tpu.memory_space<vmem>>, vector<1x128xf32>
    %122 = vector.shape_cast %121 : vector<1x128xf32> to vector<128xf32>
    %123 = vector.shape_cast %122 : vector<128xf32> to vector<1x128xf32>
    %124 = vector.broadcast %123 : vector<1x128xf32> to vector<16x128xf32>
    %125 = arith.addf %120, %124 : vector<16x128xf32>
    %126 = arith.truncf %125 : vector<16x128xf32> to vector<16x128xbf16>
    %c4_i32 = arith.constant 4 : i32
    %127 = vector.broadcast %c4_i32 : i32 to vector<16x1xi32>
    %128 = arith.cmpi sge, %1, %127 : vector<16x1xi32>
    %129 = arith.extui %128 : vector<16x1xi1> to vector<16x1xi32>
    %130 = arith.sitofp %129 : vector<16x1xi32> to vector<16x1xf32>
    %c4_i32_47 = arith.constant 4 : i32
    %131 = tpu.dynamic_rotate %11 by %c4_i32_47 dim 0 : vector<16x128xf32>, i32 -> vector<16x128xf32>
    %132 = vector.broadcast %130 : vector<16x1xf32> to vector<16x128xf32>
    %133 = arith.mulf %131, %132 : vector<16x128xf32>
    %134 = arith.truncf %133 : vector<16x128xf32> to vector<16x128xbf16>
    %c1_i32_48 = arith.constant 1 : i32
    %135 = vector.broadcast %c1_i32_48 : i32 to vector<16x1xi32>
    %136 = arith.cmpi sge, %1, %135 : vector<16x1xi32>
    %137 = arith.extui %136 : vector<16x1xi1> to vector<16x1xi32>
    %138 = arith.sitofp %137 : vector<16x1xi32> to vector<16x1xf32>
    %c1_i32_49 = arith.constant 1 : i32
    %139 = tpu.dynamic_rotate %11 by %c1_i32_49 dim 0 : vector<16x128xf32>, i32 -> vector<16x128xf32>
    %140 = vector.broadcast %138 : vector<16x1xf32> to vector<16x128xf32>
    %141 = arith.mulf %139, %140 : vector<16x128xf32>
    %142 = arith.truncf %141 : vector<16x128xf32> to vector<16x128xbf16>
    %143 = arith.truncf %11 : vector<16x128xf32> to vector<16x128xbf16>
    %c15_i32 = arith.constant 15 : i32
    %144 = vector.broadcast %c15_i32 : i32 to vector<16x1xi32>
    %145 = arith.cmpi slt, %1, %144 : vector<16x1xi32>
    %146 = arith.extui %145 : vector<16x1xi1> to vector<16x1xi32>
    %147 = arith.sitofp %146 : vector<16x1xi32> to vector<16x1xf32>
    %c15_i32_50 = arith.constant 15 : i32
    %148 = tpu.dynamic_rotate %11 by %c15_i32_50 dim 0 : vector<16x128xf32>, i32 -> vector<16x128xf32>
    %149 = vector.broadcast %147 : vector<16x1xf32> to vector<16x128xf32>
    %150 = arith.mulf %148, %149 : vector<16x128xf32>
    %151 = arith.truncf %150 : vector<16x128xf32> to vector<16x128xbf16>
    %c12_i32 = arith.constant 12 : i32
    %152 = vector.broadcast %c12_i32 : i32 to vector<16x1xi32>
    %153 = arith.cmpi slt, %1, %152 : vector<16x1xi32>
    %154 = arith.extui %153 : vector<16x1xi1> to vector<16x1xi32>
    %155 = arith.sitofp %154 : vector<16x1xi32> to vector<16x1xf32>
    %c12_i32_51 = arith.constant 12 : i32
    %156 = tpu.dynamic_rotate %11 by %c12_i32_51 dim 0 : vector<16x128xf32>, i32 -> vector<16x128xf32>
    %157 = vector.broadcast %155 : vector<16x1xf32> to vector<16x128xf32>
    %158 = arith.mulf %156, %157 : vector<16x128xf32>
    %159 = arith.truncf %158 : vector<16x128xf32> to vector<16x128xbf16>
    %160 = tpu.concatenate %126, %134, %142, %143, %151, %159 in 1 : vector<16x128xbf16>, vector<16x128xbf16>, vector<16x128xbf16>, vector<16x128xbf16>, vector<16x128xbf16>, vector<16x128xbf16> -> vector<16x768xbf16>
    %c0_52 = arith.constant 0 : index
    %c0_53 = arith.constant 0 : index
    %161 = vector.load %arg12[%c0_52, %c0_53] : memref<768x128xbf16, #tpu.memory_space<vmem>>, vector<768x128xbf16>
    %cst_54 = arith.constant dense<0.000000e+00> : vector<16x128xf32>
    %162 = tpu.matmul %160, %161, %cst_54 {dimension_numbers = #tpu.dot_dimension_numbers<[1], [0], [0], [1], [0, 0, 1, 1], [], []>} : vector<16x768xbf16>, vector<768x128xbf16>, vector<16x128xf32> -> vector<16x128xf32>
    %cst_55 = arith.constant 0.000000e+00 : f32
    %163 = vector.broadcast %cst_55 : f32 to vector<16x128xf32>
    %164 = arith.maximumf %162, %163 : vector<16x128xf32>
    %cst_56 = arith.constant dense<0.000000e+00> : vector<16xf32>
    %165 = vector.multi_reduction <add>, %164, %cst_56 [1] : vector<16x128xf32> to vector<16xf32>
    %166 = vector.shape_cast %165 : vector<16xf32> to vector<16x1xf32>
    %cst_57 = arith.constant 1.280000e+02 : f32
    %167 = vector.broadcast %cst_57 : f32 to vector<16x1xf32>
    %168 = arith.divf %166, %167 : vector<16x1xf32>
    %169 = vector.broadcast %168 : vector<16x1xf32> to vector<16x128xf32>
    %170 = arith.subf %164, %169 : vector<16x128xf32>
    %171 = arith.mulf %170, %170 : vector<16x128xf32>
    %cst_58 = arith.constant dense<0.000000e+00> : vector<16xf32>
    %172 = vector.multi_reduction <add>, %171, %cst_58 [1] : vector<16x128xf32> to vector<16xf32>
    %173 = vector.shape_cast %172 : vector<16xf32> to vector<16x1xf32>
    %cst_59 = arith.constant 1.280000e+02 : f32
    %174 = vector.broadcast %cst_59 : f32 to vector<16x1xf32>
    %175 = arith.divf %173, %174 : vector<16x1xf32>
    %176 = vector.broadcast %168 : vector<16x1xf32> to vector<16x128xf32>
    %177 = arith.subf %164, %176 : vector<16x128xf32>
    %cst_60 = arith.constant 9.99999974E-6 : f32
    %178 = vector.broadcast %cst_60 : f32 to vector<16x1xf32>
    %179 = arith.addf %175, %178 : vector<16x1xf32>
    %180 = math.rsqrt %179 : vector<16x1xf32>
    %181 = vector.broadcast %180 : vector<16x1xf32> to vector<16x128xf32>
    %182 = arith.mulf %177, %181 : vector<16x128xf32>
    %c2_61 = arith.constant 2 : index
    %c0_62 = arith.constant 0 : index
    %183 = vector.load %arg10[%c2_61, %c0_62] : memref<4x128xf32, #tpu.memory_space<vmem>>, vector<1x128xf32>
    %184 = vector.shape_cast %183 : vector<1x128xf32> to vector<128xf32>
    %185 = vector.shape_cast %184 : vector<128xf32> to vector<1x128xf32>
    %186 = vector.broadcast %185 : vector<1x128xf32> to vector<16x128xf32>
    %187 = arith.mulf %182, %186 : vector<16x128xf32>
    %c3_63 = arith.constant 3 : index
    %c0_64 = arith.constant 0 : index
    %188 = vector.load %arg10[%c3_63, %c0_64] : memref<4x128xf32, #tpu.memory_space<vmem>>, vector<1x128xf32>
    %189 = vector.shape_cast %188 : vector<1x128xf32> to vector<128xf32>
    %190 = vector.shape_cast %189 : vector<128xf32> to vector<1x128xf32>
    %191 = vector.broadcast %190 : vector<1x128xf32> to vector<16x128xf32>
    %192 = arith.addf %187, %191 : vector<16x128xf32>
    %193 = arith.truncf %192 : vector<16x128xf32> to vector<16x128xbf16>
    %c0_65 = arith.constant 0 : index
    %c0_66 = arith.constant 0 : index
    %194 = vector.load %arg13[%c0_65, %c0_66] : memref<128x64xbf16, #tpu.memory_space<vmem>>, vector<128x64xbf16>
    %cst_67 = arith.constant dense<0.000000e+00> : vector<16x64xf32>
    %195 = tpu.matmul %193, %194, %cst_67 {dimension_numbers = #tpu.dot_dimension_numbers<[1], [0], [0], [1], [0, 0, 1, 1], [], []>} : vector<16x128xbf16>, vector<128x64xbf16>, vector<16x64xf32> -> vector<16x64xf32>
    %cst_68 = arith.constant 0.000000e+00 : f32
    %196 = vector.broadcast %cst_68 : f32 to vector<16x64xf32>
    %197 = arith.maximumf %195, %196 : vector<16x64xf32>
    %198 = arith.truncf %197 : vector<16x64xf32> to vector<16x64xbf16>
    %c0_69 = arith.constant 0 : index
    %c0_70 = arith.constant 0 : index
    %199 = vector.load %arg14[%c0_69, %c0_70] : memref<64x2xbf16, #tpu.memory_space<vmem>>, vector<64x2xbf16>
    %cst_71 = arith.constant dense<0.000000e+00> : vector<16x2xf32>
    %200 = tpu.matmul %198, %199, %cst_71 {dimension_numbers = #tpu.dot_dimension_numbers<[1], [0], [0], [1], [0, 0, 1, 1], [], []>} : vector<16x64xbf16>, vector<64x2xbf16>, vector<16x2xf32> -> vector<16x2xf32>
    %cst_72 = arith.constant 0.000000e+00 : f32
    %201 = vector.broadcast %cst_72 : f32 to vector<16x2xf32>
    %202 = arith.maximumf %200, %201 : vector<16x2xf32>
    %203 = math.absf %200 : vector<16x2xf32>
    %cst_73 = arith.constant 0.000000e+00 : f32
    %204 = vector.broadcast %cst_73 : f32 to vector<16x2xf32>
    %205 = arith.subf %204, %203 : vector<16x2xf32>
    %206 = math.exp %205 : vector<16x2xf32>
    %207 = math.log1p %206 : vector<16x2xf32>
    %208 = arith.addf %202, %207 : vector<16x2xf32>
    %209 = arith.negf %200 : vector<16x2xf32>
    %210 = math.exp %209 : vector<16x2xf32>
    %cst_74 = arith.constant 1.000000e+00 : f32
    %211 = vector.broadcast %cst_74 : f32 to vector<16x2xf32>
    %212 = arith.addf %211, %210 : vector<16x2xf32>
    %213 = arith.divf %211, %212 : vector<16x2xf32>
    %214 = tpu.iota {dimensions = array<i32: 1>} : vector<16x2xi32>
    %c0_i32 = arith.constant 0 : i32
    %215 = vector.broadcast %c0_i32 : i32 to vector<16x2xi32>
    %216 = arith.cmpi eq, %214, %215 : vector<16x2xi32>
    %217 = arith.select %216, %208, %213 : vector<16x2xi1>, vector<16x2xf32>
    %218 = vector.shape_cast %217 : vector<16x2xf32> to vector<1x16x2xf32>
    %c0_75 = arith.constant 0 : index
    %c0_76 = arith.constant 0 : index
    %c0_77 = arith.constant 0 : index
    %219 = vector.load %arg15[%c0_75, %c0_76, %c0_77] : memref<1x16x2xf32, #tpu.memory_space<vmem>>, vector<1x16x2xf32>
    tpu.vector_store %arg15[%c0_75, %c0_76, %c0_77], %218 {strides = array<i32>} : memref<1x16x2xf32, #tpu.memory_space<vmem>>, vector<1x16x2xf32>,
    return
  }
  func.func @transform_0(%arg0: i32) -> (i32, i32, i32) {
    %c0_i32 = arith.constant 0 : i32
    %c0_i32_0 = arith.constant 0 : i32
    %c0_i32_1 = arith.constant 0 : i32
    return %arg0, %c0_i32, %c0_i32_0 : i32, i32, i32
  }
  func.func @transform_1(%arg0: i32) -> (i32, i32, i32) {
    %c0_i32 = arith.constant 0 : i32
    %c0_i32_0 = arith.constant 0 : i32
    %c0_i32_1 = arith.constant 0 : i32
    return %arg0, %c0_i32, %c0_i32_0 : i32, i32, i32
  }
  func.func @transform_2(%arg0: i32) -> (i32, i32) {
    %c0_i32 = arith.constant 0 : i32
    %c0_i32_0 = arith.constant 0 : i32
    %c0_i32_1 = arith.constant 0 : i32
    return %c0_i32, %c0_i32_0 : i32, i32
  }
  func.func @transform_3(%arg0: i32) -> (i32, i32) {
    %c0_i32 = arith.constant 0 : i32
    %c0_i32_0 = arith.constant 0 : i32
    %c0_i32_1 = arith.constant 0 : i32
    return %c0_i32, %c0_i32_0 : i32, i32
  }
  func.func @transform_4(%arg0: i32) -> (i32, i32) {
    %c0_i32 = arith.constant 0 : i32
    %c0_i32_0 = arith.constant 0 : i32
    %c0_i32_1 = arith.constant 0 : i32
    return %c0_i32, %c0_i32_0 : i32, i32
  }
  func.func @transform_5(%arg0: i32) -> (i32, i32) {
    %c0_i32 = arith.constant 0 : i32
    %c0_i32_0 = arith.constant 0 : i32
    %c0_i32_1 = arith.constant 0 : i32
    return %c0_i32, %c0_i32_0 : i32, i32
  }
  func.func @transform_6(%arg0: i32) -> (i32, i32) {
    %c0_i32 = arith.constant 0 : i32
    %c0_i32_0 = arith.constant 0 : i32
    %c0_i32_1 = arith.constant 0 : i32
    return %c0_i32, %c0_i32_0 : i32, i32
  }
  func.func @transform_7(%arg0: i32) -> (i32, i32) {
    %c0_i32 = arith.constant 0 : i32
    %c0_i32_0 = arith.constant 0 : i32
    %c0_i32_1 = arith.constant 0 : i32
    return %c0_i32, %c0_i32_0 : i32, i32
  }
  func.func @transform_8(%arg0: i32) -> (i32, i32) {
    %c0_i32 = arith.constant 0 : i32
    %c0_i32_0 = arith.constant 0 : i32
    %c0_i32_1 = arith.constant 0 : i32
    return %c0_i32, %c0_i32_0 : i32, i32
  }
  func.func @transform_9(%arg0: i32) -> (i32, i32) {
    %c0_i32 = arith.constant 0 : i32
    %c0_i32_0 = arith.constant 0 : i32
    %c0_i32_1 = arith.constant 0 : i32
    return %c0_i32, %c0_i32_0 : i32, i32
  }
  func.func @transform_10(%arg0: i32) -> (i32, i32) {
    %c0_i32 = arith.constant 0 : i32
    %c0_i32_0 = arith.constant 0 : i32
    %c0_i32_1 = arith.constant 0 : i32
    return %c0_i32, %c0_i32_0 : i32, i32
  }
  func.func @transform_11(%arg0: i32) -> (i32, i32) {
    %c0_i32 = arith.constant 0 : i32
    %c0_i32_0 = arith.constant 0 : i32
    %c0_i32_1 = arith.constant 0 : i32
    return %c0_i32, %c0_i32_0 : i32, i32
  }
  func.func @transform_12(%arg0: i32) -> (i32, i32) {
    %c0_i32 = arith.constant 0 : i32
    %c0_i32_0 = arith.constant 0 : i32
    %c0_i32_1 = arith.constant 0 : i32
    return %c0_i32, %c0_i32_0 : i32, i32
  }
  func.func @transform_13(%arg0: i32) -> (i32, i32) {
    %c0_i32 = arith.constant 0 : i32
    %c0_i32_0 = arith.constant 0 : i32
    %c0_i32_1 = arith.constant 0 : i32
    return %c0_i32, %c0_i32_0 : i32, i32
  }
  func.func @transform_14(%arg0: i32) -> (i32, i32, i32) {
    %c0_i32 = arith.constant 0 : i32
    %c0_i32_0 = arith.constant 0 : i32
    %c0_i32_1 = arith.constant 0 : i32
    return %arg0, %c0_i32, %c0_i32_0 : i32, i32, i32
  }
}

</mosaic_0001>

<llo_original>
// kernel: _forward_jit.1
$region0: #{_forward_jit.1}
  #allocation0 [shape = 'u32[]', space=smem, size = 0x4, offset = 0x4, fixed_abs, tag = 'smem constant byte address 0x4 - core index']
  #allocation1 [shape = 'u32[144,128]{1,0:T(1,128)}', space=vmem, size = 0x12000, scoped, tag = 'internal scratch']
  %s0 = inlined_call_operand.vmem [shape: f32[2,16,128], index: 0, kind: input, shape index: {}]
  %s1 = inlined_call_operand.vmem [shape: f32[2,1,128], index: 1, kind: input, shape index: {}]
  %s2 = inlined_call_operand.hbm [shape: bf16[128,128], index: 2, kind: input, shape index: {}]
  %s3 = inlined_call_operand.vmem [shape: bf16[128,256], index: 3, kind: input, shape index: {}]
  %s4 = inlined_call_operand.hbm [shape: bf16[128,256], index: 4, kind: input, shape index: {}]
  %s5 = inlined_call_operand.vmem [shape: f32[6,256], index: 5, kind: input, shape index: {}]
  %s6 = inlined_call_operand.vmem [shape: bf16[256,64], index: 6, kind: input, shape index: {}]
  %s7 = inlined_call_operand.hbm [shape: bf16[64,256], index: 7, kind: input, shape index: {}]
  %s8 = inlined_call_operand.hbm [shape: bf16[256,128], index: 8, kind: input, shape index: {}]
  %s9 = inlined_call_operand.hbm [shape: f32[4,128], index: 9, kind: input, shape index: {}]
  %s10 = inlined_call_operand.vmem [shape: bf16[16,16], index: 10, kind: input, shape index: {}]
  %s11 = inlined_call_operand.vmem [shape: bf16[768,128], index: 11, kind: input, shape index: {}]
  %s12 = inlined_call_operand.vmem [shape: bf16[128,64], index: 12, kind: input, shape index: {}]
  %s13 = inlined_call_operand.vmem [shape: bf16[64,2], index: 13, kind: input, shape index: {}]
  %s14 = inlined_call_operand.vmem [shape: f32[2,16,2], index: 14, kind: output, shape index: {}]
  %s15 = sld [smem:[#allocation0]]
  $region109: #{_forward_jit.1} parent=0
    _
  %s17 = ssub.s32 1, %s15
  %s18 = scalar_select 0, %s17, %s15
  $region1: #{_forward_jit.1} parent=0
    #allocation2 [shape = 'u8[32768]{0}', space=vmem, size = 0x8000, scoped, tag = 'input window, operand 2, single buffered']
    #allocation3 [shape = 's32[2]{0}', space=sflag, size = 0x8, scoped, tag = 'scoped memory for _forward_jit.1']
    #allocation4 [shape = 'u8[65536]{0}', space=vmem, size = 0x10000, scoped, tag = 'input window, operand 4, single buffered']
    #allocation5 [shape = 's32[1]{0}', space=sflag, size = 0x4, scoped, tag = 'scoped memory for _forward_jit.1']
    #allocation6 [shape = 'u8[32768]{0}', space=vmem, size = 0x8000, scoped, tag = 'input window, operand 7, single buffered']
    #allocation7 [shape = 'u8[65536]{0}', space=vmem, size = 0x10000, scoped, tag = 'input window, operand 8, single buffered']
    #allocation8 [shape = 's32[1]{0}', space=sflag, size = 0x4, scoped, tag = 'scoped memory for _forward_jit.1']
    #allocation9 [shape = 'u8[2048]{0}', space=vmem, size = 0x800, scoped, tag = 'input window, operand 9, single buffered']
    %19 = vsyncpa [#allocation3], 0
    %20 = vsyncpa [#allocation5], 0
    %21 = vsyncpa [#allocation8], 0
    loop: start=0, step=1, limit=4
    $region2: #{_forward_jit.1} parent=1 // loop_pre_header
      _
    $region3: #{_forward_jit.1} parent=1 // loop_header
      %s23 = sphi 0, %s27
      %p24 = scmp.ge.s32.totalorder %s23, 4
      %s33 = sphi 0, %s35
      %s36 = sphi 0, %s33
      %s37 = sphi 0, %s36
      %s53 = sphi 0, %s37
      %s59 = sphi 0, %s61
      %s62 = sphi 0, %s59
      %s63 = sphi 0, %s62
      %s79 = sphi 0, %s63
      %s83 = sphi 0, %s83
      %s85 = sphi 0, %s83
      %s86 = sphi 0, %s85
      %s100 = sphi 0, %s86
      %s104 = sphi 0, %s104
      %s106 = sphi 0, %s104
      %s107 = sphi 0, %s106
      %s121 = sphi 0, %s107
      %s125 = sphi 0, %s125
      %s127 = sphi 0, %s125
      %s128 = sphi 0, %s127
      %s142 = sphi 0, %s128
      %s146 = sphi 0, %s146
      %s148 = sphi 0, %s146
      %s149 = sphi 0, %s148
      %s163 = sphi 0, %s149
      %s167 = sphi 0, %s167
      %s169 = sphi 0, %s167
      %s170 = sphi 0, %s169
      %s184 = sphi 0, %s170
      %s188 = sphi 0, %s188
      %s190 = sphi 0, %s188
      %s191 = sphi 0, %s190
      %s205 = sphi 0, %s191
      %s209 = sphi 0, %s209
      %s211 = sphi 0, %s209
      %s212 = sphi 0, %s211
      %s226 = sphi 0, %s212
      %s230 = sphi 0, %s230
      %s232 = sphi 0, %s230
      %s233 = sphi 0, %s232
      %s247 = sphi 0, %s233
      %s251 = sphi 0, %s251
      %s253 = sphi 0, %s251
      %s254 = sphi 0, %s253
      %s268 = sphi 0, %s254
      %s272 = sphi 0, %s272
      %s274 = sphi 0, %s272
      %s275 = sphi 0, %s274
      %s289 = sphi 0, %s275
      %s293 = sphi 0, %s293
      %s295 = sphi 0, %s293
      %s296 = sphi 0, %s295
      %s310 = sphi 0, %s296
      %s314 = sphi 0, %s314
      %s316 = sphi 0, %s314
      %s317 = sphi 0, %s316
      %s331 = sphi 0, %s317
      %s337 = sphi 0, %s339
      %s340 = sphi 0, %s337
      %s341 = sphi 0, %s340
      %s357 = sphi 0, %s341
    $region4: #{_forward_jit.1} parent=1 // loop_header_branch
      %26 = sbr.rel (%p24) target = $region8
    $region5: #{_forward_jit.1} parent=1 // loop_body
      %s28 = ssub.s32 %s23, 1
      %s29 = ssub.s32 %s23, 2
      %s30 = sadd.s32 %s23, 1
      %s31 = ssub.s32 %s23, %s30
      %p32 = scmp.eq.s32.totalorder %s31, 0
      %s34 = sadd.s32 %s33, 1
      %s35 = scalar_select %p32, %s33, %s34
      %p38 = pneg %p32
      %p39 = scmp.eq.s32.totalorder %s23, 1
      %p40 = por %p38, %p39
      %p41 = scmp.ne.s32.totalorder %s33, %s36
      %p42 = scmp.eq.s32.totalorder %s23, 0
      %p43 = por %p41, %p42
      %p44 = scmp.ne.s32.totalorder %s33, %s36
      %p45 = scmp.eq.s32.totalorder %s28, 1
      %p46 = por %p44, %p45
      %p47 = scmp.ne.s32.totalorder %s36, %s37
      %p48 = scmp.eq.s32.totalorder %s28, 0
      %p49 = por %p47, %p48
      %p50 = scmp.ne.s32.totalorder %s36, %s37
      %p51 = scmp.eq.s32.totalorder %s29, 1
      %p52 = por %p50, %p51
      %p54 = scmp.ne.s32.totalorder %s37, %s53
      %p55 = scmp.eq.s32.totalorder %s29, 0
      %p56 = por %p54, %p55
      %s57 = ssub.s32 %s23, %s30
      %p58 = scmp.eq.s32.totalorder %s57, 0
      %s60 = sadd.s32 %s59, 1
      %s61 = scalar_select %p58, %s59, %s60
      %p64 = pneg %p58
      %p65 = scmp.eq.s32.totalorder %s23, 1
      %p66 = por %p64, %p65
      %p67 = scmp.ne.s32.totalorder %s59, %s62
      %p68 = scmp.eq.s32.totalorder %s23, 0
      %p69 = por %p67, %p68
      %p70 = scmp.ne.s32.totalorder %s59, %s62
      %p71 = scmp.eq.s32.totalorder %s28, 1
      %p72 = por %p70, %p71
      %p73 = scmp.ne.s32.totalorder %s62, %s63
      %p74 = scmp.eq.s32.totalorder %s28, 0
      %p75 = por %p73, %p74
      %p76 = scmp.ne.s32.totalorder %s62, %s63
      %p77 = scmp.eq.s32.totalorder %s29, 1
      %p78 = por %p76, %p77
      %p80 = scmp.ne.s32.totalorder %s63, %s79
      %p81 = scmp.eq.s32.totalorder %s29, 0
      %p82 = por %p80, %p81
      %s84 = sadd.s32 %s83, 1
      %p87 = scmp.eq.s32.totalorder %s23, 1
      %p88 = scmp.ne.s32.totalorder %s83, %s85
      %p89 = scmp.eq.s32.totalorder %s23, 0
      %p90 = por %p88, %p89
      %p91 = scmp.ne.s32.totalorder %s83, %s85
      %p92 = scmp.eq.s32.totalorder %s28, 1
      %p93 = por %p91, %p92
      %p94 = scmp.ne.s32.totalorder %s85, %s86
      %p95 = scmp.eq.s32.totalorder %s28, 0
      %p96 = por %p94, %p95
      %p97 = scmp.ne.s32.totalorder %s85, %s86
      %p98 = scmp.eq.s32.totalorder %s29, 1
      %p99 = por %p97, %p98
      %p101 = scmp.ne.s32.totalorder %s86, %s100
      %p102 = scmp.eq.s32.totalorder %s29, 0
      %p103 = por %p101, %p102
      %s105 = sadd.s32 %s104, 1
      %p108 = scmp.eq.s32.totalorder %s23, 1
      %p109 = scmp.ne.s32.totalorder %s104, %s106
      %p110 = scmp.eq.s32.totalorder %s23, 0
      %p111 = por %p109, %p110
      %p112 = scmp.ne.s32.totalorder %s104, %s106
      %p113 = scmp.eq.s32.totalorder %s28, 1
      %p114 = por %p112, %p113
      %p115 = scmp.ne.s32.totalorder %s106, %s107
      %p116 = scmp.eq.s32.totalorder %s28, 0
      %p117 = por %p115, %p116
      %p118 = scmp.ne.s32.totalorder %s106, %s107
      %p119 = scmp.eq.s32.totalorder %s29, 1
      %p120 = por %p118, %p119
      %p122 = scmp.ne.s32.totalorder %s107, %s121
      %p123 = scmp.eq.s32.totalorder %s29, 0
      %p124 = por %p122, %p123
      %s126 = sadd.s32 %s125, 1
      %p129 = scmp.eq.s32.totalorder %s23, 1
      %p130 = scmp.ne.s32.totalorder %s125, %s127
      %p131 = scmp.eq.s32.totalorder %s23, 0
      %p132 = por %p130, %p131
      %p133 = scmp.ne.s32.totalorder %s125, %s127
      %p134 = scmp.eq.s32.totalorder %s28, 1
      %p135 = por %p133, %p134
      %p136 = scmp.ne.s32.totalorder %s127, %s128
      %p137 = scmp.eq.s32.totalorder %s28, 0
      %p138 = por %p136, %p137
      %p139 = scmp.ne.s32.totalorder %s127, %s128
      %p140 = scmp.eq.s32.totalorder %s29, 1
      %p141 = por %p139, %p140
      %p143 = scmp.ne.s32.totalorder %s128, %s142
      %p144 = scmp.eq.s32.totalorder %s29, 0
      %p145 = por %p143, %p144
      %s147 = sadd.s32 %s146, 1
      %p150 = scmp.eq.s32.totalorder %s23, 1
      %p151 = scmp.ne.s32.totalorder %s146, %s148
      %p152 = scmp.eq.s32.totalorder %s23, 0
      %p153 = por %p151, %p152
      %p154 = scmp.ne.s32.totalorder %s146, %s148
      %p155 = scmp.eq.s32.totalorder %s28, 1
      %p156 = por %p154, %p155
      %p157 = scmp.ne.s32.totalorder %s148, %s149
      %p158 = scmp.eq.s32.totalorder %s28, 0
      %p159 = por %p157, %p158
      %p160 = scmp.ne.s32.totalorder %s148, %s149
      %p161 = scmp.eq.s32.totalorder %s29, 1
      %p162 = por %p160, %p161
      %p164 = scmp.ne.s32.totalorder %s149, %s163
      %p165 = scmp.eq.s32.totalorder %s29, 0
      %p166 = por %p164, %p165
      %s168 = sadd.s32 %s167, 1
      %p171 = scmp.eq.s32.totalorder %s23, 1
      %p172 = scmp.ne.s32.totalorder %s167, %s169
      %p173 = scmp.eq.s32.totalorder %s23, 0
      %p174 = por %p172, %p173
      %p175 = scmp.ne.s32.totalorder %s167, %s169
      %p176 = scmp.eq.s32.totalorder %s28, 1
      %p177 = por %p175, %p176
      %p178 = scmp.ne.s32.totalorder %s169, %s170
      %p179 = scmp.eq.s32.totalorder %s28, 0
      %p180 = por %p178, %p179
      %p181 = scmp.ne.s32.totalorder %s169, %s170
      %p182 = scmp.eq.s32.totalorder %s29, 1
      %p183 = por %p181, %p182
      %p185 = scmp.ne.s32.totalorder %s170, %s184
      %p186 = scmp.eq.s32.totalorder %s29, 0
      %p187 = por %p185, %p186
      %s189 = sadd.s32 %s188, 1
      %p192 = scmp.eq.s32.totalorder %s23, 1
      %p193 = scmp.ne.s32.totalorder %s188, %s190
      %p194 = scmp.eq.s32.totalorder %s23, 0
      %p195 = por %p193, %p194
      %p196 = scmp.ne.s32.totalorder %s188, %s190
      %p197 = scmp.eq.s32.totalorder %s28, 1
      %p198 = por %p196, %p197
      %p199 = scmp.ne.s32.totalorder %s190, %s191
      %p200 = scmp.eq.s32.totalorder %s28, 0
      %p201 = por %p199, %p200
      %p202 = scmp.ne.s32.totalorder %s190, %s191
      %p203 = scmp.eq.s32.totalorder %s29, 1
      %p204 = por %p202, %p203
      %p206 = scmp.ne.s32.totalorder %s191, %s205
      %p207 = scmp.eq.s32.totalorder %s29, 0
      %p208 = por %p206, %p207
      %s210 = sadd.s32 %s209, 1
      %p213 = scmp.eq.s32.totalorder %s23, 1
      %p214 = scmp.ne.s32.totalorder %s209, %s211
      %p215 = scmp.eq.s32.totalorder %s23, 0
      %p216 = por %p214, %p215
      %p217 = scmp.ne.s32.totalorder %s209, %s211
      %p218 = scmp.eq.s32.totalorder %s28, 1
      %p219 = por %p217, %p218
      %p220 = scmp.ne.s32.totalorder %s211, %s212
      %p221 = scmp.eq.s32.totalorder %s28, 0
      %p222 = por %p220, %p221
      %p223 = scmp.ne.s32.totalorder %s211, %s212
      %p224 = scmp.eq.s32.totalorder %s29, 1
      %p225 = por %p223, %p224
      %p227 = scmp.ne.s32.totalorder %s212, %s226
      %p228 = scmp.eq.s32.totalorder %s29, 0
      %p229 = por %p227, %p228
      %s231 = sadd.s32 %s230, 1
      %p234 = scmp.eq.s32.totalorder %s23, 1
      %p235 = scmp.ne.s32.totalorder %s230, %s232
      %p236 = scmp.eq.s32.totalorder %s23, 0
      %p237 = por %p235, %p236
      %p238 = scmp.ne.s32.totalorder %s230, %s232
      %p239 = scmp.eq.s32.totalorder %s28, 1
      %p240 = por %p238, %p239
      %p241 = scmp.ne.s32.totalorder %s232, %s233
      %p242 = scmp.eq.s32.totalorder %s28, 0
      %p243 = por %p241, %p242
      %p244 = scmp.ne.s32.totalorder %s232, %s233
      %p245 = scmp.eq.s32.totalorder %s29, 1
      %p246 = por %p244, %p245
      %p248 = scmp.ne.s32.totalorder %s233, %s247
      %p249 = scmp.eq.s32.totalorder %s29, 0
      %p250 = por %p248, %p249
      %s252 = sadd.s32 %s251, 1
      %p255 = scmp.eq.s32.totalorder %s23, 1
      %p256 = scmp.ne.s32.totalorder %s251, %s253
      %p257 = scmp.eq.s32.totalorder %s23, 0
      %p258 = por %p256, %p257
      %p259 = scmp.ne.s32.totalorder %s251, %s253
      %p260 = scmp.eq.s32.totalorder %s28, 1
      %p261 = por %p259, %p260
      %p262 = scmp.ne.s32.totalorder %s253, %s254
      %p263 = scmp.eq.s32.totalorder %s28, 0
      %p264 = por %p262, %p263
      %p265 = scmp.ne.s32.totalorder %s253, %s254
      %p266 = scmp.eq.s32.totalorder %s29, 1
      %p267 = por %p265, %p266
      %p269 = scmp.ne.s32.totalorder %s254, %s268
      %p270 = scmp.eq.s32.totalorder %s29, 0
      %p271 = por %p269, %p270
      %s273 = sadd.s32 %s272, 1
      %p276 = scmp.eq.s32.totalorder %s23, 1
      %p277 = scmp.ne.s32.totalorder %s272, %s274
      %p278 = scmp.eq.s32.totalorder %s23, 0
      %p279 = por %p277, %p278
      %p280 = scmp.ne.s32.totalorder %s272, %s274
      %p281 = scmp.eq.s32.totalorder %s28, 1
      %p282 = por %p280, %p281
      %p283 = scmp.ne.s32.totalorder %s274, %s275
      %p284 = scmp.eq.s32.totalorder %s28, 0
      %p285 = por %p283, %p284
      %p286 = scmp.ne.s32.totalorder %s274, %s275
      %p287 = scmp.eq.s32.totalorder %s29, 1
      %p288 = por %p286, %p287
      %p290 = scmp.ne.s32.totalorder %s275, %s289
      %p291 = scmp.eq.s32.totalorder %s29, 0
      %p292 = por %p290, %p291
      %s294 = sadd.s32 %s293, 1
      %p297 = scmp.eq.s32.totalorder %s23, 1
      %p298 = scmp.ne.s32.totalorder %s293, %s295
      %p299 = scmp.eq.s32.totalorder %s23, 0
      %p300 = por %p298, %p299
      %p301 = scmp.ne.s32.totalorder %s293, %s295
      %p302 = scmp.eq.s32.totalorder %s28, 1
      %p303 = por %p301, %p302
      %p304 = scmp.ne.s32.totalorder %s295, %s296
      %p305 = scmp.eq.s32.totalorder %s28, 0
      %p306 = por %p304, %p305
      %p307 = scmp.ne.s32.totalorder %s295, %s296
      %p308 = scmp.eq.s32.totalorder %s29, 1
      %p309 = por %p307, %p308
      %p311 = scmp.ne.s32.totalorder %s296, %s310
      %p312 = scmp.eq.s32.totalorder %s29, 0
      %p313 = por %p311, %p312
      %s315 = sadd.s32 %s314, 1
      %p318 = scmp.eq.s32.totalorder %s23, 1
      %p319 = scmp.ne.s32.totalorder %s314, %s316
      %p320 = scmp.eq.s32.totalorder %s23, 0
      %p321 = por %p319, %p320
      %p322 = scmp.ne.s32.totalorder %s314, %s316
      %p323 = scmp.eq.s32.totalorder %s28, 1
      %p324 = por %p322, %p323
      %p325 = scmp.ne.s32.totalorder %s316, %s317
      %p326 = scmp.eq.s32.totalorder %s28, 0
      %p327 = por %p325, %p326
      %p328 = scmp.ne.s32.totalorder %s316, %s317
      %p329 = scmp.eq.s32.totalorder %s29, 1
      %p330 = por %p328, %p329
      %p332 = scmp.ne.s32.totalorder %s317, %s331
      %p333 = scmp.eq.s32.totalorder %s29, 0
      %p334 = por %p332, %p333
      %s335 = ssub.s32 %s23, %s30
      %p336 = scmp.eq.s32.totalorder %s335, 0
      %s338 = sadd.s32 %s337, 1
      %s339 = scalar_select %p336, %s337, %s338
      %p342 = pneg %p336
      %p343 = scmp.eq.s32.totalorder %s23, 1
      %p344 = por %p342, %p343
      %p345 = scmp.ne.s32.totalorder %s337, %s340
      %p346 = scmp.eq.s32.totalorder %s23, 0
      %p347 = por %p345, %p346
      %p348 = scmp.ne.s32.totalorder %s337, %s340
      %p349 = scmp.eq.s32.totalorder %s28, 1
      %p350 = por %p348, %p349
      %p351 = scmp.ne.s32.totalorder %s340, %s341
      %p352 = scmp.eq.s32.totalorder %s28, 0
      %p353 = por %p351, %p352
      %p354 = scmp.ne.s32.totalorder %s340, %s341
      %p355 = scmp.eq.s32.totalorder %s29, 1
      %p356 = por %p354, %p355
      %p358 = scmp.ne.s32.totalorder %s341, %s357
      %p359 = scmp.eq.s32.totalorder %s29, 0
      %p360 = por %p358, %p359
      %p361 = scmp.le.s32.totalorder 1, %s23
      %p362 = scmp.lt.s32.totalorder %s23, 3
      %p363 = pnand %p361, %p362
      %p364 = pneg %p363
      // Predicated region
      $region9: #{_forward_jit.1} parent=5 // pred_check
        _
      $region10: #{_forward_jit.1} parent=5 // pred_check_branch
        %366 = sbr.rel (%p363) target = $region12
      $region11: #{_forward_jit.1} parent=5 // pred_region
        %s367 = ssub.s32 %s23, 1
        // Predicated region
        $region13: #{_forward_jit.1} parent=11 // pred_check
          %p368 = pneg %p96
        $region14: #{_forward_jit.1} parent=11 // pred_check_branch
          %370 = sbr.rel (%p368) target = $region16
        $region15: #{_forward_jit.1} parent=11 // pred_region
          %s372 = ssub.s32 1024, 1024
          %373 = vsyncadd [#allocation3], %s372
          %s374 = sshll.u32 [#allocation2], 4
          %s375 = int_to_ptr.vmem [resolvable:$true] %s374
          %380 = dma.hbm_to_vmem [thread:$0]  %s2, 1024, %s375, [#allocation3], 64, 64, 4
        $region16: #{_forward_jit.1} parent=11 // pred_fallthru
          _
        // Predicated region
        $region17: #{_forward_jit.1} parent=11 // pred_check
          %p381 = pneg %p117
        $region18: #{_forward_jit.1} parent=11 // pred_check_branch
          %383 = sbr.rel (%p381) target = $region20
        $region19: #{_forward_jit.1} parent=11 // pred_region
          _
        $region20: #{_forward_jit.1} parent=11 // pred_fallthru
          _
        // Predicated region
        $region21: #{_forward_jit.1} parent=11 // pred_check
          %p384 = pneg %p138
        $region22: #{_forward_jit.1} parent=11 // pred_check_branch
          %386 = sbr.rel (%p384) target = $region24
        $region23: #{_forward_jit.1} parent=11 // pred_region
          %s388 = ssub.s32 2048, 2048
          %389 = vsyncadd [#allocation5], %s388
          %s390 = sshll.u32 [#allocation4], 4
          %s391 = int_to_ptr.vmem [resolvable:$true] %s390
          %396 = dma.hbm_to_vmem [thread:$0]  %s4, 2048, %s391, [#allocation5], 128, 128, 8
        $region24: #{_forward_jit.1} parent=11 // pred_fallthru
          _
        // Predicated region
        $region25: #{_forward_jit.1} parent=11 // pred_check
          %p397 = pneg %p159
        $region26: #{_forward_jit.1} parent=11 // pred_check_branch
          %399 = sbr.rel (%p397) target = $region28
        $region27: #{_forward_jit.1} parent=11 // pred_region
          _
        $region28: #{_forward_jit.1} parent=11 // pred_fallthru
          _
        // Predicated region
        $region29: #{_forward_jit.1} parent=11 // pred_check
          %p400 = pneg %p180
        $region30: #{_forward_jit.1} parent=11 // pred_check_branch
          %402 = sbr.rel (%p400) target = $region32
        $region31: #{_forward_jit.1} parent=11 // pred_region
          _
        $region32: #{_forward_jit.1} parent=11 // pred_fallthru
          _
        // Predicated region
        $region33: #{_forward_jit.1} parent=11 // pred_check
          %p403 = pneg %p201
        $region34: #{_forward_jit.1} parent=11 // pred_check_branch
          %405 = sbr.rel (%p403) target = $region36
        $region35: #{_forward_jit.1} parent=11 // pred_region
          %s407 = ssub.s32 1024, 1024
          %408 = vsyncadd [#allocation5], %s407
          %s409 = sshll.u32 [#allocation6], 4
          %s410 = int_to_ptr.vmem [resolvable:$true] %s409
          %415 = dma.hbm_to_vmem [thread:$0]  %s7, 1024, %s410, [#allocation5], 128, 128, 8
        $region36: #{_forward_jit.1} parent=11 // pred_fallthru
          _
        // Predicated region
        $region37: #{_forward_jit.1} parent=11 // pred_check
          %p416 = pneg %p222
        $region38: #{_forward_jit.1} parent=11 // pred_check_branch
          %418 = sbr.rel (%p416) target = $region40
        $region39: #{_forward_jit.1} parent=11 // pred_region
          %s420 = ssub.s32 2048, 2048
          %421 = vsyncadd [#allocation8], %s420
          %s422 = sshll.u32 [#allocation7], 4
          %s423 = int_to_ptr.vmem [resolvable:$true] %s422
          %428 = dma.hbm_to_vmem [thread:$0]  %s8, 2048, %s423, [#allocation8], 64, 64, 4
        $region40: #{_forward_jit.1} parent=11 // pred_fallthru
          _
        // Predicated region
        $region41: #{_forward_jit.1} parent=11 // pred_check
          %p429 = pneg %p243
        $region42: #{_forward_jit.1} parent=11 // pred_check_branch
          %431 = sbr.rel (%p429) target = $region44
        $region43: #{_forward_jit.1} parent=11 // pred_region
          %s433 = ssub.s32 64, 64
          %434 = vsyncadd [#allocation8], %s433
          %s436 = sshll.u32 [#allocation9], 4
          %s437 = int_to_ptr.vmem [resolvable:$true] %s436
          %439 = dma.hbm_to_vmem [thread:$0]  %s9, 64, %s437, [#allocation8]
        $region44: #{_forward_jit.1} parent=11 // pred_fallthru
          _
        // Predicated region
        $region45: #{_forward_jit.1} parent=11 // pred_check
          %p440 = pneg %p264
        $region46: #{_forward_jit.1} parent=11 // pred_check_branch
          %442 = sbr.rel (%p440) target = $region48
        $region47: #{_forward_jit.1} parent=11 // pred_region
          _
        $region48: #{_forward_jit.1} parent=11 // pred_fallthru
          _
        // Predicated region
        $region49: #{_forward_jit.1} parent=11 // pred_check
          %p443 = pneg %p285
        $region50: #{_forward_jit.1} parent=11 // pred_check_branch
          %445 = sbr.rel (%p443) target = $region52
        $region51: #{_forward_jit.1} parent=11 // pred_region
          _
        $region52: #{_forward_jit.1} parent=11 // pred_fallthru
          _
        // Predicated region
        $region53: #{_forward_jit.1} parent=11 // pred_check
          %p446 = pneg %p306
        $region54: #{_forward_jit.1} parent=11 // pred_check_branch
          %448 = sbr.rel (%p446) target = $region56
        $region55: #{_forward_jit.1} parent=11 // pred_region
          _
        $region56: #{_forward_jit.1} parent=11 // pred_fallthru
          _
        // Predicated region
        $region57: #{_forward_jit.1} parent=11 // pred_check
          %p449 = pneg %p327
        $region58: #{_forward_jit.1} parent=11 // pred_check_branch
          %451 = sbr.rel (%p449) target = $region60
        $region59: #{_forward_jit.1} parent=11 // pred_region
          _
        $region60: #{_forward_jit.1} parent=11 // pred_fallthru
          _
      $region12: #{_forward_jit.1} parent=5 // pred_fallthru
        _
      %p452 = scmp.lt.s32.totalorder %s23, 2
      // Predicated region
      $region61: #{_forward_jit.1} parent=5 // pred_check
        %p453 = pneg %p452
      $region62: #{_forward_jit.1} parent=5 // pred_check_branch
        %455 = sbr.rel (%p453) target = $region64
      $region63: #{_forward_jit.1} parent=5 // pred_region
        // Predicated region
        $region65: #{_forward_jit.1} parent=63 // pred_check
          %p456 = pneg %p43
        $region66: #{_forward_jit.1} parent=63 // pred_check_branch
          %458 = sbr.rel (%p456) target = $region68
        $region67: #{_forward_jit.1} parent=63 // pred_region
          %p459 = scmp.lt.s32.totalorder %s23, 1
          %s460 = scalar_select %p459, %s23, 1
          %s461 = smul.addr %s460, 2
          %s462 = smul.addr %s461, 8
          %s463 = scalar_lea.vmem %s0, %s462
        $region68: #{_forward_jit.1} parent=63 // pred_fallthru
          _
        // Predicated region
        $region69: #{_forward_jit.1} parent=63 // pred_check
          %p464 = pneg %p69
        $region70: #{_forward_jit.1} parent=63 // pred_check_branch
          %466 = sbr.rel (%p464) target = $region72
        $region71: #{_forward_jit.1} parent=63 // pred_region
          %p467 = scmp.lt.s32.totalorder %s23, 1
          %s468 = scalar_select %p467, %s23, 1
          %s469 = scalar_lea.vmem %s1, %s468
        $region72: #{_forward_jit.1} parent=63 // pred_fallthru
          _
      $region64: #{_forward_jit.1} parent=5 // pred_fallthru
        _
      %p470 = scmp.le.s32.totalorder 1, %s23
      %p471 = scmp.lt.s32.totalorder %s23, 3
      %p472 = pnand %p470, %p471
      %p473 = pneg %p472
      // Predicated region
      $region73: #{_forward_jit.1} parent=5 // pred_check
        _
      $region74: #{_forward_jit.1} parent=5 // pred_check_branch
        %475 = sbr.rel (%p472) target = $region76
      $region75: #{_forward_jit.1} parent=5 // pred_region
        %s476 = ssub.s32 %s23, 1
        // Predicated region
        $region77: #{_forward_jit.1} parent=75 // pred_check
          %p477 = pneg %p96
        $region78: #{_forward_jit.1} parent=75 // pred_check_branch
          %479 = sbr.rel (%p477) target = $region80
        $region79: #{_forward_jit.1} parent=75 // pred_region
          %480 = dma.done [#allocation3], 1024
        $region80: #{_forward_jit.1} parent=75 // pred_fallthru
          _
        // Predicated region
        $region81: #{_forward_jit.1} parent=75 // pred_check
          %p481 = pneg %p138
        $region82: #{_forward_jit.1} parent=75 // pred_check_branch
          %483 = sbr.rel (%p481) target = $region84
        $region83: #{_forward_jit.1} parent=75 // pred_region
          %484 = dma.done [#allocation5], 2048
        $region84: #{_forward_jit.1} parent=75 // pred_fallthru
          _
        // Predicated region
        $region85: #{_forward_jit.1} parent=75 // pred_check
          %p485 = pneg %p201
        $region86: #{_forward_jit.1} parent=75 // pred_check_branch
          %487 = sbr.rel (%p485) target = $region88
        $region87: #{_forward_jit.1} parent=75 // pred_region
          %488 = dma.done [#allocation5], 1024
        $region88: #{_forward_jit.1} parent=75 // pred_fallthru
          _
        // Predicated region
        $region89: #{_forward_jit.1} parent=75 // pred_check
          %p489 = pneg %p222
        $region90: #{_forward_jit.1} parent=75 // pred_check_branch
          %491 = sbr.rel (%p489) target = $region92
        $region91: #{_forward_jit.1} parent=75 // pred_region
          %492 = dma.done [#allocation8], 2048
        $region92: #{_forward_jit.1} parent=75 // pred_fallthru
          _
        // Predicated region
        $region93: #{_forward_jit.1} parent=75 // pred_check
          %p493 = pneg %p243
        $region94: #{_forward_jit.1} parent=75 // pred_check_branch
          %495 = sbr.rel (%p493) target = $region96
        $region95: #{_forward_jit.1} parent=75 // pred_region
          %496 = dma.done [#allocation8], 64
        $region96: #{_forward_jit.1} parent=75 // pred_fallthru
          _
        %p497 = scmp.lt.s32.totalorder %s28, 1
        %s498 = scalar_select %p497, %s28, 1
        %s499 = smul.addr %s498, 2
        %s500 = smul.addr %s499, 8
        %s501 = scalar_lea.vmem %s0, %s500
        %p502 = pneg %p49
        %p503 = pneg %p46
        %p504 = scmp.lt.s32.totalorder %s28, 1
        %s505 = scalar_select %p504, %s28, 1
        %s506 = scalar_lea.vmem %s1, %s505
        %p507 = pneg %p75
        %p508 = pneg %p72
        %p509 = pneg %p96
        %p510 = pneg %p93
        %p511 = pneg %p117
        %p512 = pneg %p114
        %p513 = pneg %p138
        %p514 = pneg %p135
        %p515 = pneg %p159
        %p516 = pneg %p156
        %p517 = pneg %p180
        %p518 = pneg %p177
        %p519 = pneg %p201
        %p520 = pneg %p198
        %p521 = pneg %p222
        %p522 = pneg %p219
        %p523 = pneg %p243
        %p524 = pneg %p240
        %p525 = pneg %p264
        %p526 = pneg %p261
        %p527 = pneg %p285
        %p528 = pneg %p282
        %p529 = pneg %p306
        %p530 = pneg %p303
        %p531 = pneg %p327
        %p532 = pneg %p324
        %p533 = pneg %p353
        %p534 = pneg %p350
        %p535 = scmp.lt.s32.totalorder %s28, 1
        %s536 = scalar_select %p535, %s28, 1
        %s537 = smul.addr %s536, 2
        %s538 = smul.addr %s537, 8
        %s539 = scalar_lea.vmem %s14, %s538
        %p540 = scmp.lt.s32.totalorder %s28, 1
        %s541 = scalar_select %p540, %s28, 1
        %s542 = smul.addr %s541, 2
        %s543 = smul.addr %s542, 8
        %s544 = scalar_lea.vmem %s0, %s543
        %p545 = scmp.lt.s32.totalorder %s28, 1
        %s546 = scalar_select %p545, %s28, 1
        %s547 = scalar_lea.vmem %s1, %s546
        %p548 = scmp.lt.s32.totalorder %s28, 1
        %s549 = scalar_select %p548, %s28, 1
        %s550 = smul.addr %s549, 2
        %s551 = smul.addr %s550, 8
        %s552 = scalar_lea.vmem %s14, %s551
        %v554 = vlaneseq
        %v555 = vshrl.u32 %v554, 7
        %v556 = vadd.s32 %v555, 8
        %v557 = vld [vmem:[%s544] sm:$0xff]
        %v558 = vld [vmem:[%s544 + $0x8] sm:$0xff]
        %v559 = vld [vmem:[%s547] sm:$0x1]
        %v560 = vadd.f32 %v559, 1.0
        %v562 = vlaneseq
        %v563 = vshrl.u32 %v562, 7
        %v564 = vsub.s32 0, %v563
        %v565 = vrot.slane %v560, %v564
        %v567 = vmul.f32 %v557, %v565
        %v568 = vmul.f32 %v558, %v565
        %v569 = vpack.c.bf16 %v568, %v567
        %v570 = vld [vmem:[#allocation2] sm:$0xf]
        %v571 = vld [vmem:[#allocation2 + $0x4] sm:$0xf]
        %v572 = vld [vmem:[#allocation2 + $0x8] sm:$0xf]
        %v573 = vld [vmem:[#allocation2 + $0xc] sm:$0xf]
        %v574 = vld [vmem:[#allocation2 + $0x10] sm:$0xf]
        %v575 = vld [vmem:[#allocation2 + $0x14] sm:$0xf]
        %v576 = vld [vmem:[#allocation2 + $0x18] sm:$0xf]
        %v577 = vld [vmem:[#allocation2 + $0x1c] sm:$0xf]
        %v578 = vld [vmem:[#allocation2 + $0x20] sm:$0xf]
        %v579 = vld [vmem:[#allocation2 + $0x24] sm:$0xf]
        %v580 = vld [vmem:[#allocation2 + $0x28] sm:$0xf]
        %v581 = vld [vmem:[#allocation2 + $0x2c] sm:$0xf]
        %v582 = vld [vmem:[#allocation2 + $0x30] sm:$0xf]
        %v583 = vld [vmem:[#allocation2 + $0x34] sm:$0xf]
        %v584 = vld [vmem:[#allocation2 + $0x38] sm:$0xf]
        %v585 = vld [vmem:[#allocation2 + $0x3c] sm:$0xf]
        %v602 = vunpack.c.l.b16 %v570
        %v603 = vunpack.c.l.b16 %v571
        %v604 = vunpack.c.l.b16 %v572
        %v605 = vunpack.c.l.b16 %v573
        %v606 = vunpack.c.l.b16 %v574
        %v607 = vunpack.c.l.b16 %v575
        %v608 = vunpack.c.l.b16 %v576
        %v609 = vunpack.c.l.b16 %v577
        %v610 = vunpack.c.l.b16 %v578
        %v611 = vunpack.c.l.b16 %v579
        %v612 = vunpack.c.l.b16 %v580
        %v613 = vunpack.c.l.b16 %v581
        %v614 = vunpack.c.l.b16 %v582
        %v615 = vunpack.c.l.b16 %v583
        %v616 = vunpack.c.l.b16 %v584
        %v617 = vunpack.c.l.b16 %v585
        %v618 = vpack.c.b16 %v603, %v602
        %v619 = vpack.c.b16 %v605, %v604
        %v620 = vpack.c.b16 %v607, %v606
        %v621 = vpack.c.b16 %v609, %v608
        %v622 = vpack.c.b16 %v611, %v610
        %v623 = vpack.c.b16 %v613, %v612
        %v624 = vpack.c.b16 %v615, %v614
        %v625 = vpack.c.b16 %v617, %v616
        %634 = vmatprep.subr.bf16.mxu0 0
        %635 = vmatpush1.bf16.msra.mxu0 %v618
        %636 = vmatprep.subr.bf16.mxu0 0
        %637 = vmatpush1.bf16.msra.mxu0 %v619
        %638 = vmatprep.subr.bf16.mxu0 0
        %639 = vmatpush1.bf16.msra.mxu0 %v620
        %640 = vmatprep.subr.bf16.mxu0 0
        %641 = vmatpush1.bf16.msra.mxu0 %v621
        %642 = vmatprep.subr.bf16.mxu0 0
        %643 = vmatpush1.bf16.msra.mxu0 %v622
        %644 = vmatprep.subr.bf16.mxu0 0
        %645 = vmatpush1.bf16.msra.mxu0 %v623
        %646 = vmatprep.subr.bf16.mxu0 0
        %647 = vmatpush1.bf16.msra.mxu0 %v624
        %648 = vmatprep.subr.bf16.mxu0 0
        %649 = vmatpush1.bf16.msra.mxu0 %v625
        %650 = vmatprep.subr.bf16.mxu0 0
        %651 = vmatpush1.bf16.msra.mxu0 0
        %652 = vmatprep.subr.bf16.mxu0 0
        %653 = vmatpush1.bf16.msra.mxu0 0
        %654 = vmatprep.subr.bf16.mxu0 0
        %655 = vmatpush1.bf16.msra.mxu0 0
        %656 = vmatprep.subr.bf16.mxu0 0
        %657 = vmatpush1.bf16.msra.mxu0 0
        %658 = vmatprep.subr.bf16.mxu0 0
        %659 = vmatpush1.bf16.msra.mxu0 0
        %660 = vmatprep.subr.bf16.mxu0 0
        %661 = vmatpush1.bf16.msra.mxu0 0
        %662 = vmatprep.subr.bf16.mxu0 0
        %663 = vmatpush1.bf16.msra.mxu0 0
        %664 = vmatprep.subr.bf16.mxu0 0
        %665 = vmatpush1.bf16.msra.mxu0 0
        %666 = vmatprep.mubr.bf16.mxu0 0
        %667 = vmatmul.mubr.bf16.gmra.mrb[0].mxu0 %v569
        %v668 = vpop.f32.mrb[0].mxu0
        %v669 = vadd.f32 0.0, %v668
        %v670 = vpop.f32.mrb[0].mxu0
        %v671 = vpop.f32.mrb[0].mxu0
        %v672 = vadd.f32 0.0, %v671
        %v673 = vpop.f32.mrb[0].mxu0
        %674 = vdwg.mxu0
        %v675 = vpack.c.bf16 %v672, %v669
        %v676 = vld [vmem:[%s3] sm:$0xff]
        %v677 = vld [vmem:[%s3 + $0x8] sm:$0xff]
        %v678 = vld [vmem:[%s3 + $0x10] sm:$0xff]
        %v679 = vld [vmem:[%s3 + $0x18] sm:$0xff]
        %v680 = vld [vmem:[%s3 + $0x20] sm:$0xff]
        %v681 = vld [vmem:[%s3 + $0x28] sm:$0xff]
        %v682 = vld [vmem:[%s3 + $0x30] sm:$0xff]
        %v683 = vld [vmem:[%s3 + $0x38] sm:$0xff]
        %v684 = vld [vmem:[%s3 + $0x40] sm:$0xff]
        %v685 = vld [vmem:[%s3 + $0x48] sm:$0xff]
        %v686 = vld [vmem:[%s3 + $0x50] sm:$0xff]
        %v687 = vld [vmem:[%s3 + $0x58] sm:$0xff]
        %v688 = vld [vmem:[%s3 + $0x60] sm:$0xff]
        %v689 = vld [vmem:[%s3 + $0x68] sm:$0xff]
        %v690 = vld [vmem:[%s3 + $0x70] sm:$0xff]
        %v691 = vld [vmem:[%s3 + $0x78] sm:$0xff]
        %v708 = vunpack.c.l.b16 %v676
        %v709 = vunpack.c.h.b16 %v676
        %v710 = vunpack.c.l.b16 %v677
        %v711 = vunpack.c.h.b16 %v677
        %v712 = vunpack.c.l.b16 %v678
        %v713 = vunpack.c.h.b16 %v678
        %v714 = vunpack.c.l.b16 %v679
        %v715 = vunpack.c.h.b16 %v679
        %v716 = vunpack.c.l.b16 %v680
        %v717 = vunpack.c.h.b16 %v680
        %v718 = vunpack.c.l.b16 %v681
        %v719 = vunpack.c.h.b16 %v681
        %v720 = vunpack.c.l.b16 %v682
        %v721 = vunpack.c.h.b16 %v682
        %v722 = vunpack.c.l.b16 %v683
        %v723 = vunpack.c.h.b16 %v683
        %v724 = vunpack.c.l.b16 %v684
        %v725 = vunpack.c.h.b16 %v684
        %v726 = vunpack.c.l.b16 %v685
        %v727 = vunpack.c.h.b16 %v685
        %v728 = vunpack.c.l.b16 %v686
        %v729 = vunpack.c.h.b16 %v686
        %v730 = vunpack.c.l.b16 %v687
        %v731 = vunpack.c.h.b16 %v687
        %v732 = vunpack.c.l.b16 %v688
        %v733 = vunpack.c.h.b16 %v688
        %v734 = vunpack.c.l.b16 %v689
        %v735 = vunpack.c.h.b16 %v689
        %v736 = vunpack.c.l.b16 %v690
        %v737 = vunpack.c.h.b16 %v690
        %v738 = vunpack.c.l.b16 %v691
        %v739 = vunpack.c.h.b16 %v691
        %v740 = vpack.c.b16 %v710, %v708
        %v741 = vpack.c.b16 %v711, %v709
        %v742 = vpack.c.b16 %v714, %v712
        %v743 = vpack.c.b16 %v715, %v713
        %v744 = vpack.c.b16 %v718, %v716
        %v745 = vpack.c.b16 %v719, %v717
        %v746 = vpack.c.b16 %v722, %v720
        %v747 = vpack.c.b16 %v723, %v721
        %v748 = vpack.c.b16 %v726, %v724
        %v749 = vpack.c.b16 %v727, %v725
        %v750 = vpack.c.b16 %v730, %v728
        %v751 = vpack.c.b16 %v731, %v729
        %v752 = vpack.c.b16 %v734, %v732
        %v753 = vpack.c.b16 %v735, %v733
        %v754 = vpack.c.b16 %v738, %v736
        %v755 = vpack.c.b16 %v739, %v737
        %772 = vmatprep.subr.bf16.mxu0 %v741
        %773 = vmatpush1.bf16.msra.mxu0 %v740
        %774 = vmatprep.subr.bf16.mxu0 %v743
        %775 = vmatpush1.bf16.msra.mxu0 %v742
        %776 = vmatprep.subr.bf16.mxu0 %v745
        %777 = vmatpush1.bf16.msra.mxu0 %v744
        %778 = vmatprep.subr.bf16.mxu0 %v747
        %779 = vmatpush1.bf16.msra.mxu0 %v746
        %780 = vmatprep.subr.bf16.mxu0 %v749
        %781 = vmatpush1.bf16.msra.mxu0 %v748
        %782 = vmatprep.subr.bf16.mxu0 %v751
        %783 = vmatpush1.bf16.msra.mxu0 %v750
        %784 = vmatprep.subr.bf16.mxu0 %v753
        %785 = vmatpush1.bf16.msra.mxu0 %v752
        %786 = vmatprep.subr.bf16.mxu0 %v755
        %787 = vmatpush1.bf16.msra.mxu0 %v754
        %788 = vmatprep.subr.bf16.mxu0 0
        %789 = vmatpush1.bf16.msra.mxu0 0
        %790 = vmatprep.subr.bf16.mxu0 0
        %791 = vmatpush1.bf16.msra.mxu0 0
        %792 = vmatprep.subr.bf16.mxu0 0
        %793 = vmatpush1.bf16.msra.mxu0 0
        %794 = vmatprep.subr.bf16.mxu0 0
        %795 = vmatpush1.bf16.msra.mxu0 0
        %796 = vmatprep.subr.bf16.mxu0 0
        %797 = vmatpush1.bf16.msra.mxu0 0
        %798 = vmatprep.subr.bf16.mxu0 0
        %799 = vmatpush1.bf16.msra.mxu0 0
        %800 = vmatprep.subr.bf16.mxu0 0
        %801 = vmatpush1.bf16.msra.mxu0 0
        %802 = vmatprep.subr.bf16.mxu0 0
        %803 = vmatpush1.bf16.msra.mxu0 0
        %804 = vmatprep.mubr.bf16.mxu0 0
        %805 = vmatmul.mubr.bf16.gmra.mrb[0].mxu0 %v675
        %v806 = vpop.f32.mrb[0].mxu0
        %v807 = vadd.f32 0.0, %v806
        %v808 = vpop.f32.mrb[0].mxu0
        %v809 = vadd.f32 0.0, %v808
        %v810 = vpop.f32.mrb[0].mxu0
        %v811 = vadd.f32 0.0, %v810
        %v812 = vpop.f32.mrb[0].mxu0
        %v813 = vadd.f32 0.0, %v812
        %814 = vdwg.mxu0
        %v815 = vld [vmem:[#allocation4] sm:$0xff]
        %v816 = vld [vmem:[#allocation4 + $0x8] sm:$0xff]
        %v817 = vld [vmem:[#allocation4 + $0x10] sm:$0xff]
        %v818 = vld [vmem:[#allocation4 + $0x18] sm:$0xff]
        %v819 = vld [vmem:[#allocation4 + $0x20] sm:$0xff]
        %v820 = vld [vmem:[#allocation4 + $0x28] sm:$0xff]
        %v821 = vld [vmem:[#allocation4 + $0x30] sm:$0xff]
        %v822 = vld [vmem:[#allocation4 + $0x38] sm:$0xff]
        %v823 = vld [vmem:[#allocation4 + $0x40] sm:$0xff]
        %v824 = vld [vmem:[#allocation4 + $0x48] sm:$0xff]
        %v825 = vld [vmem:[#allocation4 + $0x50] sm:$0xff]
        %v826 = vld [vmem:[#allocation4 + $0x58] sm:$0xff]
        %v827 = vld [vmem:[#allocation4 + $0x60] sm:$0xff]
        %v828 = vld [vmem:[#allocation4 + $0x68] sm:$0xff]
        %v829 = vld [vmem:[#allocation4 + $0x70] sm:$0xff]
        %v830 = vld [vmem:[#allocation4 + $0x78] sm:$0xff]
        %v847 = vunpack.c.l.b16 %v815
        %v848 = vunpack.c.h.b16 %v815
        %v849 = vunpack.c.l.b16 %v816
        %v850 = vunpack.c.h.b16 %v816
        %v851 = vunpack.c.l.b16 %v817
        %v852 = vunpack.c.h.b16 %v817
        %v853 = vunpack.c.l.b16 %v818
        %v854 = vunpack.c.h.b16 %v818
        %v855 = vunpack.c.l.b16 %v819
        %v856 = vunpack.c.h.b16 %v819
        %v857 = vunpack.c.l.b16 %v820
        %v858 = vunpack.c.h.b16 %v820
        %v859 = vunpack.c.l.b16 %v821
        %v860 = vunpack.c.h.b16 %v821
        %v861 = vunpack.c.l.b16 %v822
        %v862 = vunpack.c.h.b16 %v822
        %v863 = vunpack.c.l.b16 %v823
        %v864 = vunpack.c.h.b16 %v823
        %v865 = vunpack.c.l.b16 %v824
        %v866 = vunpack.c.h.b16 %v824
        %v867 = vunpack.c.l.b16 %v825
        %v868 = vunpack.c.h.b16 %v825
        %v869 = vunpack.c.l.b16 %v826
        %v870 = vunpack.c.h.b16 %v826
        %v871 = vunpack.c.l.b16 %v827
        %v872 = vunpack.c.h.b16 %v827
        %v873 = vunpack.c.l.b16 %v828
        %v874 = vunpack.c.h.b16 %v828
        %v875 = vunpack.c.l.b16 %v829
        %v876 = vunpack.c.h.b16 %v829
        %v877 = vunpack.c.l.b16 %v830
        %v878 = vunpack.c.h.b16 %v830
        %v879 = vpack.c.b16 %v849, %v847
        %v880 = vpack.c.b16 %v850, %v848
        %v881 = vpack.c.b16 %v853, %v851
        %v882 = vpack.c.b16 %v854, %v852
        %v883 = vpack.c.b16 %v857, %v855
        %v884 = vpack.c.b16 %v858, %v856
        %v885 = vpack.c.b16 %v861, %v859
        %v886 = vpack.c.b16 %v862, %v860
        %v887 = vpack.c.b16 %v865, %v863
        %v888 = vpack.c.b16 %v866, %v864
        %v889 = vpack.c.b16 %v869, %v867
        %v890 = vpack.c.b16 %v870, %v868
        %v891 = vpack.c.b16 %v873, %v871
        %v892 = vpack.c.b16 %v874, %v872
        %v893 = vpack.c.b16 %v877, %v875
        %v894 = vpack.c.b16 %v878, %v876
        %911 = vmatprep.subr.bf16.mxu0 %v880
        %912 = vmatpush1.bf16.msra.mxu0 %v879
        %913 = vmatprep.subr.bf16.mxu0 %v882
        %914 = vmatpush1.bf16.msra.mxu0 %v881
        %915 = vmatprep.subr.bf16.mxu0 %v884
        %916 = vmatpush1.bf16.msra.mxu0 %v883
        %917 = vmatprep.subr.bf16.mxu0 %v886
        %918 = vmatpush1.bf16.msra.mxu0 %v885
        %919 = vmatprep.subr.bf16.mxu0 %v888
        %920 = vmatpush1.bf16.msra.mxu0 %v887
        %921 = vmatprep.subr.bf16.mxu0 %v890
        %922 = vmatpush1.bf16.msra.mxu0 %v889
        %923 = vmatprep.subr.bf16.mxu0 %v892
        %924 = vmatpush1.bf16.msra.mxu0 %v891
        %925 = vmatprep.subr.bf16.mxu0 %v894
        %926 = vmatpush1.bf16.msra.mxu0 %v893
        %927 = vmatprep.subr.bf16.mxu0 0
        %928 = vmatpush1.bf16.msra.mxu0 0
        %929 = vmatprep.subr.bf16.mxu0 0
        %930 = vmatpush1.bf16.msra.mxu0 0
        %931 = vmatprep.subr.bf16.mxu0 0
        %932 = vmatpush1.bf16.msra.mxu0 0
        %933 = vmatprep.subr.bf16.mxu0 0
        %934 = vmatpush1.bf16.msra.mxu0 0
        %935 = vmatprep.subr.bf16.mxu0 0
        %936 = vmatpush1.bf16.msra.mxu0 0
        %937 = vmatprep.subr.bf16.mxu0 0
        %938 = vmatpush1.bf16.msra.mxu0 0
        %939 = vmatprep.subr.bf16.mxu0 0
        %940 = vmatpush1.bf16.msra.mxu0 0
        %941 = vmatprep.subr.bf16.mxu0 0
        %942 = vmatpush1.bf16.msra.mxu0 0
        %943 = vmatprep.mubr.bf16.mxu0 0
        %944 = vmatmul.mubr.bf16.gmra.mrb[0].mxu0 %v675
        %v945 = vpop.f32.mrb[0].mxu0
        %v946 = vadd.f32 0.0, %v945
        %v947 = vpop.f32.mrb[0].mxu0
        %v948 = vadd.f32 0.0, %v947
        %v949 = vpop.f32.mrb[0].mxu0
        %v950 = vadd.f32 0.0, %v949
        %v951 = vpop.f32.mrb[0].mxu0
        %v952 = vadd.f32 0.0, %v951
        %953 = vdwg.mxu0
        %s954 = scalar_lea.vmem %s5, 3
        %v955 = vld [vmem:[%s954] ss:$8 sm:$0x3]
        %v957 = vlaneseq
        %v958 = vshrl.u32 %v957, 7
        %v959 = vsub.s32 0, %v958
        %v960 = vrot.slane %v955, %v959
        %v961 = vlaneseq
        %v962 = vshrl.u32 %v961, 7
        %v963 = vsub.s32 1, %v962
        %v964 = vrot.slane %v955, %v963
        %v967 = vmul.f32 %v807, %v960
        %v968 = vmul.f32 %v809, %v964
        %v969 = vmul.f32 %v811, %v960
        %v970 = vmul.f32 %v813, %v964
        %s971 = scalar_lea.vmem %s5, 4
        %v972 = vld [vmem:[%s971] ss:$8 sm:$0x3]
        %v974 = vlaneseq
        %v975 = vshrl.u32 %v974, 7
        %v976 = vsub.s32 0, %v975
        %v977 = vrot.slane %v972, %v976
        %v978 = vlaneseq
        %v979 = vshrl.u32 %v978, 7
        %v980 = vsub.s32 1, %v979
        %v981 = vrot.slane %v972, %v980
        %v984 = vadd.f32 %v967, %v977
        %v985 = vadd.f32 %v968, %v981
        %v986 = vadd.f32 %v969, %v977
        %v987 = vadd.f32 %v970, %v981
        %vm988 = vcmp.ge.s32.totalorder %v555, 3
        %vm989 = vcmp.ge.s32.totalorder %v556, 3
        %v990 = vsel %vm988, 1, 0
        %v991 = vsel %vm989, 1, 0
        %v992 = vcvt.s32.f32 %v990
        %v993 = vcvt.s32.f32 %v991
        %v994 = vrot.slane %v807, 5
        %v995 = vrot.slane %v809, 5
        %v996 = vrot.slane %v811, 5
        %v997 = vrot.slane %v813, 5
        %vm998 = vcmp.lt.s32.totalorder %v555, 3
        %v999 = vsel %vm998, %v994, %v996
        %v1000 = vsel %vm998, %v995, %v997
        %v1001 = vsel %vm998, %v996, %v994
        %v1002 = vsel %vm998, %v997, %v995
        %v1003 = vmul.f32 %v1001, %v992
        %v1004 = vmul.f32 %v1002, %v992
        %v1005 = vmul.f32 %v999, %v993
        %v1006 = vmul.f32 %v1000, %v993
        %v1007 = vld [vmem:[%s5] ss:$8 sm:$0x3]
        %v1009 = vlaneseq
        %v1010 = vshrl.u32 %v1009, 7
        %v1011 = vsub.s32 0, %v1010
        %v1012 = vrot.slane %v1007, %v1011
        %v1013 = vlaneseq
        %v1014 = vshrl.u32 %v1013, 7
        %v1015 = vsub.s32 1, %v1014
        %v1016 = vrot.slane %v1007, %v1015
        %v1019 = vmul.f32 %v1003, %v1012
        %v1020 = vmul.f32 %v1004, %v1016
        %v1021 = vmul.f32 %v1005, %v1012
        %v1022 = vmul.f32 %v1006, %v1016
        %v1023 = vadd.f32 %v984, %v1019
        %v1024 = vadd.f32 %v985, %v1020
        %v1025 = vadd.f32 %v986, %v1021
        %v1026 = vadd.f32 %v987, %v1022
        %vm1027 = vcmp.ge.s32.totalorder %v555, 2
        %vm1028 = vcmp.ge.s32.totalorder %v556, 2
        %v1029 = vsel %vm1027, 1, 0
        %v1030 = vsel %vm1028, 1, 0
        %v1031 = vcvt.s32.f32 %v1029
        %v1032 = vcvt.s32.f32 %v1030
        %v1033 = vrot.slane %v807, 6
        %v1034 = vrot.slane %v809, 6
        %v1035 = vrot.slane %v811, 6
        %v1036 = vrot.slane %v813, 6
        %vm1037 = vcmp.lt.s32.totalorder %v555, 2
        %v1038 = vsel %vm1037, %v1033, %v1035
        %v1039 = vsel %vm1037, %v1034, %v1036
        %v1040 = vsel %vm1037, %v1035, %v1033
        %v1041 = vsel %vm1037, %v1036, %v1034
        %v1042 = vmul.f32 %v1040, %v1031
        %v1043 = vmul.f32 %v1041, %v1031
        %v1044 = vmul.f32 %v1038, %v1032
        %v1045 = vmul.f32 %v1039, %v1032
        %s1046 = scalar_lea.vmem %s5, 1
        %v1047 = vld [vmem:[%s1046] ss:$8 sm:$0x3]
        %v1049 = vlaneseq
        %v1050 = vshrl.u32 %v1049, 7
        %v1051 = vsub.s32 0, %v1050
        %v1052 = vrot.slane %v1047, %v1051
        %v1053 = vlaneseq
        %v1054 = vshrl.u32 %v1053, 7
        %v1055 = vsub.s32 1, %v1054
        %v1056 = vrot.slane %v1047, %v1055
        %v1059 = vmul.f32 %v1042, %v1052
        %v1060 = vmul.f32 %v1043, %v1056
        %v1061 = vmul.f32 %v1044, %v1052
        %v1062 = vmul.f32 %v1045, %v1056
        %v1063 = vadd.f32 %v1023, %v1059
        %v1064 = vadd.f32 %v1024, %v1060
        %v1065 = vadd.f32 %v1025, %v1061
        %v1066 = vadd.f32 %v1026, %v1062
        %vm1067 = vcmp.ge.s32.totalorder %v555, 1
        %vm1068 = vcmp.ge.s32.totalorder %v556, 1
        %v1069 = vsel %vm1067, 1, 0
        %v1070 = vsel %vm1068, 1, 0
        %v1071 = vcvt.s32.f32 %v1069
        %v1072 = vcvt.s32.f32 %v1070
        %v1073 = vrot.slane %v807, 7
        %v1074 = vrot.slane %v809, 7
        %v1075 = vrot.slane %v811, 7
        %v1076 = vrot.slane %v813, 7
        %vm1077 = vcmp.lt.s32.totalorder %v555, 1
        %v1078 = vsel %vm1077, %v1073, %v1075
        %v1079 = vsel %vm1077, %v1074, %v1076
        %v1080 = vsel %vm1077, %v1075, %v1073
        %v1081 = vsel %vm1077, %v1076, %v1074
        %v1082 = vmul.f32 %v1080, %v1071
        %v1083 = vmul.f32 %v1081, %v1071
        %v1084 = vmul.f32 %v1078, %v1072
        %v1085 = vmul.f32 %v1079, %v1072
        %s1086 = scalar_lea.vmem %s5, 2
        %v1087 = vld [vmem:[%s1086] ss:$8 sm:$0x3]
        %v1089 = vlaneseq
        %v1090 = vshrl.u32 %v1089, 7
        %v1091 = vsub.s32 0, %v1090
        %v1092 = vrot.slane %v1087, %v1091
        %v1093 = vlaneseq
        %v1094 = vshrl.u32 %v1093, 7
        %v1095 = vsub.s32 1, %v1094
        %v1096 = vrot.slane %v1087, %v1095
        %v1099 = vmul.f32 %v1082, %v1092
        %v1100 = vmul.f32 %v1083, %v1096
        %v1101 = vmul.f32 %v1084, %v1092
        %v1102 = vmul.f32 %v1085, %v1096
        %v1103 = vadd.f32 %v1063, %v1099
        %v1104 = vadd.f32 %v1064, %v1100
        %v1105 = vadd.f32 %v1065, %v1101
        %v1106 = vadd.f32 %v1066, %v1102
        %v1107 = vxor.u32 %v1103, 2147483648
        %v1108 = vxor.u32 %v1104, 2147483648
        %v1109 = vxor.u32 %v1105, 2147483648
        %v1110 = vxor.u32 %v1106, 2147483648
        %v1111 = vmul.f32 %v1107, 1.442695
        %v1112 = vpow.pop %v1111
        %v1113 = vmul.f32 %v1108, 1.442695
        %v1114 = vpow.pop %v1113
        %v1115 = vmul.f32 %v1109, 1.442695
        %v1116 = vpow.pop %v1115
        %v1117 = vmul.f32 %v1110, 1.442695
        %v1118 = vpow.pop %v1117
        %v1119 = vadd.f32 %v1112, 1.0
        %v1120 = vadd.f32 %v1114, 1.0
        %v1121 = vadd.f32 %v1116, 1.0
        %v1122 = vadd.f32 %v1118, 1.0
        %v1123 = vrcp.pop %v1119
        %v1124 = vmul.f32 1.0, %v1123
        %v1125 = vrcp.pop %v1120
        %v1126 = vmul.f32 1.0, %v1125
        %v1127 = vrcp.pop %v1121
        %v1128 = vmul.f32 1.0, %v1127
        %v1129 = vrcp.pop %v1122
        %v1130 = vmul.f32 1.0, %v1129
        %v1131 = vmul.f32 %v1103, %v1124
        %v1132 = vmul.f32 %v1104, %v1126
        %v1133 = vmul.f32 %v1105, %v1128
        %v1134 = vmul.f32 %v1106, %v1130
        %v1135 = vpack.c.bf16 %v1133, %v1131
        %v1136 = vpack.c.bf16 %v1134, %v1132
        %v1137 = vld [vmem:[%s6] sm:$0xf]
        %v1138 = vld [vmem:[%s6 + $0x4] sm:$0xf]
        %v1139 = vld [vmem:[%s6 + $0x8] sm:$0xf]
        %v1140 = vld [vmem:[%s6 + $0xc] sm:$0xf]
        %v1141 = vld [vmem:[%s6 + $0x10] sm:$0xf]
        %v1142 = vld [vmem:[%s6 + $0x14] sm:$0xf]
        %v1143 = vld [vmem:[%s6 + $0x18] sm:$0xf]
        %v1144 = vld [vmem:[%s6 + $0x1c] sm:$0xf]
        %v1145 = vld [vmem:[%s6 + $0x20] sm:$0xf]
        %v1146 = vld [vmem:[%s6 + $0x24] sm:$0xf]
        %v1147 = vld [vmem:[%s6 + $0x28] sm:$0xf]
        %v1148 = vld [vmem:[%s6 + $0x2c] sm:$0xf]
        %v1149 = vld [vmem:[%s6 + $0x30] sm:$0xf]
        %v1150 = vld [vmem:[%s6 + $0x34] sm:$0xf]
        %v1151 = vld [vmem:[%s6 + $0x38] sm:$0xf]
        %v1152 = vld [vmem:[%s6 + $0x3c] sm:$0xf]
        %v1153 = vld [vmem:[%s6 + $0x40] sm:$0xf]
        %v1154 = vld [vmem:[%s6 + $0x44] sm:$0xf]
        %v1155 = vld [vmem:[%s6 + $0x48] sm:$0xf]
        %v1156 = vld [vmem:[%s6 + $0x4c] sm:$0xf]
        %v1157 = vld [vmem:[%s6 + $0x50] sm:$0xf]
        %v1158 = vld [vmem:[%s6 + $0x54] sm:$0xf]
        %v1159 = vld [vmem:[%s6 + $0x58] sm:$0xf]
        %v1160 = vld [vmem:[%s6 + $0x5c] sm:$0xf]
        %v1161 = vld [vmem:[%s6 + $0x60] sm:$0xf]
        %v1162 = vld [vmem:[%s6 + $0x64] sm:$0xf]
        %v1163 = vld [vmem:[%s6 + $0x68] sm:$0xf]
        %v1164 = vld [vmem:[%s6 + $0x6c] sm:$0xf]
        %v1165 = vld [vmem:[%s6 + $0x70] sm:$0xf]
        %v1166 = vld [vmem:[%s6 + $0x74] sm:$0xf]
        %v1167 = vld [vmem:[%s6 + $0x78] sm:$0xf]
        %v1168 = vld [vmem:[%s6 + $0x7c] sm:$0xf]
        %v1201 = vunpack.c.l.b16 %v1137
        %v1202 = vunpack.c.l.b16 %v1138
        %v1203 = vunpack.c.l.b16 %v1139
        %v1204 = vunpack.c.l.b16 %v1140
        %v1205 = vunpack.c.l.b16 %v1141
        %v1206 = vunpack.c.l.b16 %v1142
        %v1207 = vunpack.c.l.b16 %v1143
        %v1208 = vunpack.c.l.b16 %v1144
        %v1209 = vunpack.c.l.b16 %v1145
        %v1210 = vunpack.c.l.b16 %v1146
        %v1211 = vunpack.c.l.b16 %v1147
        %v1212 = vunpack.c.l.b16 %v1148
        %v1213 = vunpack.c.l.b16 %v1149
        %v1214 = vunpack.c.l.b16 %v1150
        %v1215 = vunpack.c.l.b16 %v1151
        %v1216 = vunpack.c.l.b16 %v1152
        %v1217 = vunpack.c.l.b16 %v1153
        %v1218 = vunpack.c.l.b16 %v1154
        %v1219 = vunpack.c.l.b16 %v1155
        %v1220 = vunpack.c.l.b16 %v1156
        %v1221 = vunpack.c.l.b16 %v1157
        %v1222 = vunpack.c.l.b16 %v1158
        %v1223 = vunpack.c.l.b16 %v1159
        %v1224 = vunpack.c.l.b16 %v1160
        %v1225 = vunpack.c.l.b16 %v1161
        %v1226 = vunpack.c.l.b16 %v1162
        %v1227 = vunpack.c.l.b16 %v1163
        %v1228 = vunpack.c.l.b16 %v1164
        %v1229 = vunpack.c.l.b16 %v1165
        %v1230 = vunpack.c.l.b16 %v1166
        %v1231 = vunpack.c.l.b16 %v1167
        %v1232 = vunpack.c.l.b16 %v1168
        %v1233 = vpack.c.b16 %v1202, %v1201
        %v1234 = vpack.c.b16 %v1204, %v1203
        %v1235 = vpack.c.b16 %v1206, %v1205
        %v1236 = vpack.c.b16 %v1208, %v1207
        %v1237 = vpack.c.b16 %v1210, %v1209
        %v1238 = vpack.c.b16 %v1212, %v1211
        %v1239 = vpack.c.b16 %v1214, %v1213
        %v1240 = vpack.c.b16 %v1216, %v1215
        %v1241 = vpack.c.b16 %v1218, %v1217
        %v1242 = vpack.c.b16 %v1220, %v1219
        %v1243 = vpack.c.b16 %v1222, %v1221
        %v1244 = vpack.c.b16 %v1224, %v1223
        %v1245 = vpack.c.b16 %v1226, %v1225
        %v1246 = vpack.c.b16 %v1228, %v1227
        %v1247 = vpack.c.b16 %v1230, %v1229
        %v1248 = vpack.c.b16 %v1232, %v1231
        %1265 = vmatprep.subr.bf16.mxu0 0
        %1266 = vmatpush1.bf16.msra.mxu0 %v1233
        %1267 = vmatprep.subr.bf16.mxu0 0
        %1268 = vmatpush1.bf16.msra.mxu0 %v1234
        %1269 = vmatprep.subr.bf16.mxu0 0
        %1270 = vmatpush1.bf16.msra.mxu0 %v1235
        %1271 = vmatprep.subr.bf16.mxu0 0
        %1272 = vmatpush1.bf16.msra.mxu0 %v1236
        %1273 = vmatprep.subr.bf16.mxu0 0
        %1274 = vmatpush1.bf16.msra.mxu0 %v1237
        %1275 = vmatprep.subr.bf16.mxu0 0
        %1276 = vmatpush1.bf16.msra.mxu0 %v1238
        %1277 = vmatprep.subr.bf16.mxu0 0
        %1278 = vmatpush1.bf16.msra.mxu0 %v1239
        %1279 = vmatprep.subr.bf16.mxu0 0
        %1280 = vmatpush1.bf16.msra.mxu0 %v1240
        %1281 = vmatprep.subr.bf16.mxu0 0
        %1282 = vmatpush1.bf16.msra.mxu0 %v1241
        %1283 = vmatprep.subr.bf16.mxu0 0
        %1284 = vmatpush1.bf16.msra.mxu0 %v1242
        %1285 = vmatprep.subr.bf16.mxu0 0
        %1286 = vmatpush1.bf16.msra.mxu0 %v1243
        %1287 = vmatprep.subr.bf16.mxu0 0
        %1288 = vmatpush1.bf16.msra.mxu0 %v1244
        %1289 = vmatprep.subr.bf16.mxu0 0
        %1290 = vmatpush1.bf16.msra.mxu0 %v1245
        %1291 = vmatprep.subr.bf16.mxu0 0
        %1292 = vmatpush1.bf16.msra.mxu0 %v1246
        %1293 = vmatprep.subr.bf16.mxu0 0
        %1294 = vmatpush1.bf16.msra.mxu0 %v1247
        %1295 = vmatprep.subr.bf16.mxu0 0
        %1296 = vmatpush1.bf16.msra.mxu0 %v1248
        %1297 = vmatprep.mubr.bf16.mxu0 %v1136
        %1298 = vmatmul.mubr.bf16.gmra.mrb[0].mxu0 %v1135
        %v1299 = vpop.f32.mrb[0].mxu0
        %v1300 = vadd.f32 0.0, %v1299
        %v1301 = vpop.f32.mrb[0].mxu0
        %v1302 = vpop.f32.mrb[0].mxu0
        %v1303 = vadd.f32 0.0, %v1302
        %v1304 = vpop.f32.mrb[0].mxu0
        %1305 = vdwg.mxu0
        %v1306 = vld [vmem:[%s10] sm:$0xf]
        %v1307 = vld [vmem:[%s10 + $0x4] sm:$0xf]
        %v1308 = vpack.c.bf16 %v1303, %v1300
        %v1311 = vunpack.c.l.b16 %v1306
        %v1312 = vunpack.c.l.b16 %v1307
        %v1313 = vpack.c.b16 %v1312, %v1311
        %vm1314 = vcmask 130048
        %v1316 = vsel %vm1314, %v1313, 0
        %1318 = vmatprep.subr.bf16.mxu0 0
        %1319 = vmatpush1.bf16.msra.mxu0 %v1308
        %1320 = vmatprep.subr.bf16.mxu0 0
        %1321 = vmatpush1.bf16.msra.mxu0 0
        %1322 = vmatprep.subr.bf16.mxu0 0
        %1323 = vmatpush1.bf16.msra.mxu0 0
        %1324 = vmatprep.subr.bf16.mxu0 0
        %1325 = vmatpush1.bf16.msra.mxu0 0
        %1326 = vmatprep.subr.bf16.mxu0 0
        %1327 = vmatpush1.bf16.msra.mxu0 0
        %1328 = vmatprep.subr.bf16.mxu0 0
        %1329 = vmatpush1.bf16.msra.mxu0 0
        %1330 = vmatprep.subr.bf16.mxu0 0
        %1331 = vmatpush1.bf16.msra.mxu0 0
        %1332 = vmatprep.subr.bf16.mxu0 0
        %1333 = vmatpush1.bf16.msra.mxu0 0
        %1334 = vmatprep.subr.bf16.mxu0 0
        %1335 = vmatpush1.bf16.msra.mxu0 0
        %1336 = vmatprep.subr.bf16.mxu0 0
        %1337 = vmatpush1.bf16.msra.mxu0 0
        %1338 = vmatprep.subr.bf16.mxu0 0
        %1339 = vmatpush1.bf16.msra.mxu0 0
        %1340 = vmatprep.subr.bf16.mxu0 0
        %1341 = vmatpush1.bf16.msra.mxu0 0
        %1342 = vmatprep.subr.bf16.mxu0 0
        %1343 = vmatpush1.bf16.msra.mxu0 0
        %1344 = vmatprep.subr.bf16.mxu0 0
        %1345 = vmatpush1.bf16.msra.mxu0 0
        %1346 = vmatprep.subr.bf16.mxu0 0
        %1347 = vmatpush1.bf16.msra.mxu0 0
        %1348 = vmatprep.subr.bf16.mxu0 0
        %1349 = vmatpush1.bf16.msra.mxu0 0
        %1350 = vmatprep.mubr.bf16.mxu0 0
        %1351 = vmatmul.mubr.bf16.gmra.mrb[0].mxu0 %v1316
        %v1352 = vpop.f32.mrb[0].mxu0
        %v1353 = vadd.f32 0.0, %v1352
        %v1354 = vpop.f32.mrb[0].mxu0
        %v1355 = vpop.f32.mrb[0].mxu0
        %v1356 = vadd.f32 0.0, %v1355
        %v1357 = vpop.f32.mrb[0].mxu0
        %1358 = vdwg.mxu0
        %v1359 = vpack.c.bf16 %v1356, %v1353
        %v1360 = vld [vmem:[#allocation6] sm:$0xff]
        %v1361 = vld [vmem:[#allocation6 + $0x8] sm:$0xff]
        %v1362 = vld [vmem:[#allocation6 + $0x10] sm:$0xff]
        %v1363 = vld [vmem:[#allocation6 + $0x18] sm:$0xff]
        %v1364 = vld [vmem:[#allocation6 + $0x20] sm:$0xff]
        %v1365 = vld [vmem:[#allocation6 + $0x28] sm:$0xff]
        %v1366 = vld [vmem:[#allocation6 + $0x30] sm:$0xff]
        %v1367 = vld [vmem:[#allocation6 + $0x38] sm:$0xff]
        %s1368 = scalar_lea.vmem %s5, 5
        %v1369 = vld [vmem:[%s1368] ss:$8 sm:$0x3]
        %v1371 = vlaneseq
        %v1372 = vshrl.u32 %v1371, 7
        %v1373 = vsub.s32 0, %v1372
        %v1374 = vrot.slane %v1369, %v1373
        %v1375 = vlaneseq
        %v1376 = vshrl.u32 %v1375, 7
        %v1377 = vsub.s32 1, %v1376
        %v1378 = vrot.slane %v1369, %v1377
        %v1381 = vmul.f32 %v1374, %v1131
        %v1382 = vmul.f32 %v1378, %v1132
        %v1383 = vmul.f32 %v1374, %v1133
        %v1384 = vmul.f32 %v1378, %v1134
        %v1393 = vunpack.c.l.b16 %v1360
        %v1394 = vunpack.c.h.b16 %v1360
        %v1395 = vunpack.c.l.b16 %v1361
        %v1396 = vunpack.c.h.b16 %v1361
        %v1397 = vunpack.c.l.b16 %v1362
        %v1398 = vunpack.c.h.b16 %v1362
        %v1399 = vunpack.c.l.b16 %v1363
        %v1400 = vunpack.c.h.b16 %v1363
        %v1401 = vunpack.c.l.b16 %v1364
        %v1402 = vunpack.c.h.b16 %v1364
        %v1403 = vunpack.c.l.b16 %v1365
        %v1404 = vunpack.c.h.b16 %v1365
        %v1405 = vunpack.c.l.b16 %v1366
        %v1406 = vunpack.c.h.b16 %v1366
        %v1407 = vunpack.c.l.b16 %v1367
        %v1408 = vunpack.c.h.b16 %v1367
        %v1409 = vpack.c.b16 %v1395, %v1393
        %v1410 = vpack.c.b16 %v1396, %v1394
        %v1411 = vpack.c.b16 %v1399, %v1397
        %v1412 = vpack.c.b16 %v1400, %v1398
        %v1413 = vpack.c.b16 %v1403, %v1401
        %v1414 = vpack.c.b16 %v1404, %v1402
        %v1415 = vpack.c.b16 %v1407, %v1405
        %v1416 = vpack.c.b16 %v1408, %v1406
        %vm1425 = vcmask 523264
        %v1427 = vsel %vm1425, %v1359, 0
        %1429 = vmatprep.subr.bf16.mxu0 %v1410
        %1430 = vmatpush1.bf16.msra.mxu0 %v1409
        %1431 = vmatprep.subr.bf16.mxu0 %v1412
        %1432 = vmatpush1.bf16.msra.mxu0 %v1411
        %1433 = vmatprep.subr.bf16.mxu0 %v1414
        %1434 = vmatpush1.bf16.msra.mxu0 %v1413
        %1435 = vmatprep.subr.bf16.mxu0 %v1416
        %1436 = vmatpush1.bf16.msra.mxu0 %v1415
        %1437 = vmatprep.subr.bf16.mxu0 0
        %1438 = vmatpush1.bf16.msra.mxu0 0
        %1439 = vmatprep.subr.bf16.mxu0 0
        %1440 = vmatpush1.bf16.msra.mxu0 0
        %1441 = vmatprep.subr.bf16.mxu0 0
        %1442 = vmatpush1.bf16.msra.mxu0 0
        %1443 = vmatprep.subr.bf16.mxu0 0
        %1444 = vmatpush1.bf16.msra.mxu0 0
        %1445 = vmatprep.subr.bf16.mxu0 0
        %1446 = vmatpush1.bf16.msra.mxu0 0
        %1447 = vmatprep.subr.bf16.mxu0 0
        %1448 = vmatpush1.bf16.msra.mxu0 0
        %1449 = vmatprep.subr.bf16.mxu0 0
        %1450 = vmatpush1.bf16.msra.mxu0 0
        %1451 = vmatprep.subr.bf16.mxu0 0
        %1452 = vmatpush1.bf16.msra.mxu0 0
        %1453 = vmatprep.subr.bf16.mxu0 0
        %1454 = vmatpush1.bf16.msra.mxu0 0
        %1455 = vmatprep.subr.bf16.mxu0 0
        %1456 = vmatpush1.bf16.msra.mxu0 0
        %1457 = vmatprep.subr.bf16.mxu0 0
        %1458 = vmatpush1.bf16.msra.mxu0 0
        %1459 = vmatprep.subr.bf16.mxu0 0
        %1460 = vmatpush1.bf16.msra.mxu0 0
        %1461 = vmatprep.mubr.bf16.mxu0 0
        %1462 = vmatmul.mubr.bf16.gmra.mrb[0].mxu0 %v1427
        %v1463 = vpop.f32.mrb[0].mxu0
        %v1464 = vadd.f32 %v1381, %v1463
        %v1465 = vpop.f32.mrb[0].mxu0
        %v1466 = vadd.f32 %v1382, %v1465
        %v1467 = vpop.f32.mrb[0].mxu0
        %v1468 = vadd.f32 %v1383, %v1467
        %v1469 = vpop.f32.mrb[0].mxu0
        %v1470 = vadd.f32 %v1384, %v1469
        %1471 = vdwg.mxu0
        %v1472 = vxor.u32 %v946, 2147483648
        %v1473 = vxor.u32 %v948, 2147483648
        %v1474 = vxor.u32 %v950, 2147483648
        %v1475 = vxor.u32 %v952, 2147483648
        %v1476 = vmul.f32 %v1472, 1.442695
        %v1477 = vpow.pop %v1476
        %v1478 = vmul.f32 %v1473, 1.442695
        %v1479 = vpow.pop %v1478
        %v1480 = vmul.f32 %v1474, 1.442695
        %v1481 = vpow.pop %v1480
        %v1482 = vmul.f32 %v1475, 1.442695
        %v1483 = vpow.pop %v1482
        %v1484 = vadd.f32 %v1477, 1.0
        %v1485 = vadd.f32 %v1479, 1.0
        %v1486 = vadd.f32 %v1481, 1.0
        %v1487 = vadd.f32 %v1483, 1.0
        %v1488 = vrcp.pop %v1484
        %v1489 = vmul.f32 1.0, %v1488
        %v1490 = vrcp.pop %v1485
        %v1491 = vmul.f32 1.0, %v1490
        %v1492 = vrcp.pop %v1486
        %v1493 = vmul.f32 1.0, %v1492
        %v1494 = vrcp.pop %v1487
        %v1495 = vmul.f32 1.0, %v1494
        %v1496 = vmul.f32 %v946, %v1489
        %v1497 = vmul.f32 %v948, %v1491
        %v1498 = vmul.f32 %v950, %v1493
        %v1499 = vmul.f32 %v952, %v1495
        %v1500 = vmul.f32 %v1464, %v1496
        %v1501 = vmul.f32 %v1466, %v1497
        %v1502 = vmul.f32 %v1468, %v1498
        %v1503 = vmul.f32 %v1470, %v1499
        %v1504 = vpack.c.bf16 %v1502, %v1500
        %v1505 = vpack.c.bf16 %v1503, %v1501
        %v1506 = vld [vmem:[#allocation7] sm:$0xf]
        %v1507 = vld [vmem:[#allocation7 + $0x4] sm:$0xf]
        %v1508 = vld [vmem:[#allocation7 + $0x8] sm:$0xf]
        %v1509 = vld [vmem:[#allocation7 + $0xc] sm:$0xf]
        %v1510 = vld [vmem:[#allocation7 + $0x10] sm:$0xf]
        %v1511 = vld [vmem:[#allocation7 + $0x14] sm:$0xf]
        %v1512 = vld [vmem:[#allocation7 + $0x18] sm:$0xf]
        %v1513 = vld [vmem:[#allocation7 + $0x1c] sm:$0xf]
        %v1514 = vld [vmem:[#allocation7 + $0x20] sm:$0xf]
        %v1515 = vld [vmem:[#allocation7 + $0x24] sm:$0xf]
        %v1516 = vld [vmem:[#allocation7 + $0x28] sm:$0xf]
        %v1517 = vld [vmem:[#allocation7 + $0x2c] sm:$0xf]
        %v1518 = vld [vmem:[#allocation7 + $0x30] sm:$0xf]
        %v1519 = vld [vmem:[#allocation7 + $0x34] sm:$0xf]
        %v1520 = vld [vmem:[#allocation7 + $0x38] sm:$0xf]
        %v1521 = vld [vmem:[#allocation7 + $0x3c] sm:$0xf]
        %v1522 = vld [vmem:[#allocation7 + $0x40] sm:$0xf]
        %v1523 = vld [vmem:[#allocation7 + $0x44] sm:$0xf]
        %v1524 = vld [vmem:[#allocation7 + $0x48] sm:$0xf]
        %v1525 = vld [vmem:[#allocation7 + $0x4c] sm:$0xf]
        %v1526 = vld [vmem:[#allocation7 + $0x50] sm:$0xf]
        %v1527 = vld [vmem:[#allocation7 + $0x54] sm:$0xf]
        %v1528 = vld [vmem:[#allocation7 + $0x58] sm:$0xf]
        %v1529 = vld [vmem:[#allocation7 + $0x5c] sm:$0xf]
        %v1530 = vld [vmem:[#allocation7 + $0x60] sm:$0xf]
        %v1531 = vld [vmem:[#allocation7 + $0x64] sm:$0xf]
        %v1532 = vld [vmem:[#allocation7 + $0x68] sm:$0xf]
        %v1533 = vld [vmem:[#allocation7 + $0x6c] sm:$0xf]
        %v1534 = vld [vmem:[#allocation7 + $0x70] sm:$0xf]
        %v1535 = vld [vmem:[#allocation7 + $0x74] sm:$0xf]
        %v1536 = vld [vmem:[#allocation7 + $0x78] sm:$0xf]
        %v1537 = vld [vmem:[#allocation7 + $0x7c] sm:$0xf]
        %v1570 = vunpack.c.l.b16 %v1506
        %v1571 = vunpack.c.l.b16 %v1507
        %v1572 = vunpack.c.l.b16 %v1508
        %v1573 = vunpack.c.l.b16 %v1509
        %v1574 = vunpack.c.l.b16 %v1510
        %v1575 = vunpack.c.l.b16 %v1511
        %v1576 = vunpack.c.l.b16 %v1512
        %v1577 = vunpack.c.l.b16 %v1513
        %v1578 = vunpack.c.l.b16 %v1514
        %v1579 = vunpack.c.l.b16 %v1515
        %v1580 = vunpack.c.l.b16 %v1516
        %v1581 = vunpack.c.l.b16 %v1517
        %v1582 = vunpack.c.l.b16 %v1518
        %v1583 = vunpack.c.l.b16 %v1519
        %v1584 = vunpack.c.l.b16 %v1520
        %v1585 = vunpack.c.l.b16 %v1521
        %v1586 = vunpack.c.l.b16 %v1522
        %v1587 = vunpack.c.l.b16 %v1523
        %v1588 = vunpack.c.l.b16 %v1524
        %v1589 = vunpack.c.l.b16 %v1525
        %v1590 = vunpack.c.l.b16 %v1526
        %v1591 = vunpack.c.l.b16 %v1527
        %v1592 = vunpack.c.l.b16 %v1528
        %v1593 = vunpack.c.l.b16 %v1529
        %v1594 = vunpack.c.l.b16 %v1530
        %v1595 = vunpack.c.l.b16 %v1531
        %v1596 = vunpack.c.l.b16 %v1532
        %v1597 = vunpack.c.l.b16 %v1533
        %v1598 = vunpack.c.l.b16 %v1534
        %v1599 = vunpack.c.l.b16 %v1535
        %v1600 = vunpack.c.l.b16 %v1536
        %v1601 = vunpack.c.l.b16 %v1537
        %v1602 = vpack.c.b16 %v1571, %v1570
        %v1603 = vpack.c.b16 %v1573, %v1572
        %v1604 = vpack.c.b16 %v1575, %v1574
        %v1605 = vpack.c.b16 %v1577, %v1576
        %v1606 = vpack.c.b16 %v1579, %v1578
        %v1607 = vpack.c.b16 %v1581, %v1580
        %v1608 = vpack.c.b16 %v1583, %v1582
        %v1609 = vpack.c.b16 %v1585, %v1584
        %v1610 = vpack.c.b16 %v1587, %v1586
        %v1611 = vpack.c.b16 %v1589, %v1588
        %v1612 = vpack.c.b16 %v1591, %v1590
        %v1613 = vpack.c.b16 %v1593, %v1592
        %v1614 = vpack.c.b16 %v1595, %v1594
        %v1615 = vpack.c.b16 %v1597, %v1596
        %v1616 = vpack.c.b16 %v1599, %v1598
        %v1617 = vpack.c.b16 %v1601, %v1600
        %1634 = vmatprep.subr.bf16.mxu0 0
        %1635 = vmatpush1.bf16.msra.mxu0 %v1602
        %1636 = vmatprep.subr.bf16.mxu0 0
        %1637 = vmatpush1.bf16.msra.mxu0 %v1603
        %1638 = vmatprep.subr.bf16.mxu0 0
        %1639 = vmatpush1.bf16.msra.mxu0 %v1604
        %1640 = vmatprep.subr.bf16.mxu0 0
        %1641 = vmatpush1.bf16.msra.mxu0 %v1605
        %1642 = vmatprep.subr.bf16.mxu0 0
        %1643 = vmatpush1.bf16.msra.mxu0 %v1606
        %1644 = vmatprep.subr.bf16.mxu0 0
        %1645 = vmatpush1.bf16.msra.mxu0 %v1607
        %1646 = vmatprep.subr.bf16.mxu0 0
        %1647 = vmatpush1.bf16.msra.mxu0 %v1608
        %1648 = vmatprep.subr.bf16.mxu0 0
        %1649 = vmatpush1.bf16.msra.mxu0 %v1609
        %1650 = vmatprep.subr.bf16.mxu0 0
        %1651 = vmatpush1.bf16.msra.mxu0 %v1610
        %1652 = vmatprep.subr.bf16.mxu0 0
        %1653 = vmatpush1.bf16.msra.mxu0 %v1611
        %1654 = vmatprep.subr.bf16.mxu0 0
        %1655 = vmatpush1.bf16.msra.mxu0 %v1612
        %1656 = vmatprep.subr.bf16.mxu0 0
        %1657 = vmatpush1.bf16.msra.mxu0 %v1613
        %1658 = vmatprep.subr.bf16.mxu0 0
        %1659 = vmatpush1.bf16.msra.mxu0 %v1614
        %1660 = vmatprep.subr.bf16.mxu0 0
        %1661 = vmatpush1.bf16.msra.mxu0 %v1615
        %1662 = vmatprep.subr.bf16.mxu0 0
        %1663 = vmatpush1.bf16.msra.mxu0 %v1616
        %1664 = vmatprep.subr.bf16.mxu0 0
        %1665 = vmatpush1.bf16.msra.mxu0 %v1617
        %1666 = vmatprep.mubr.bf16.mxu0 %v1505
        %1667 = vmatmul.mubr.bf16.gmra.mrb[0].mxu0 %v1504
        %v1668 = vpop.f32.mrb[0].mxu0
        %v1669 = vadd.f32 %v669, %v1668
        %v1670 = vpop.f32.mrb[0].mxu0
        %v1671 = vpop.f32.mrb[0].mxu0
        %v1672 = vadd.f32 %v672, %v1671
        %v1673 = vpop.f32.mrb[0].mxu0
        %1674 = vdwg.mxu0
        %1675 = vadd.xlane.f32.xlu0 %v1669
        %v1676 = vpop.xlane.xlu0 %1675
        %1677 = vadd.xlane.f32.xlu0 %v1672
        %v1678 = vpop.xlane.xlu0 %1677
        %v1679 = vrcp.pop 128.0
        %v1680 = vmul.f32 %v1676, %v1679
        %v1681 = vmul.f32 %v1678, %v1679
        %v1682 = vsub.f32 %v1669, %v1680
        %v1683 = vsub.f32 %v1672, %v1681
        %v1684 = vmul.f32 %v1682, %v1682
        %v1685 = vmul.f32 %v1683, %v1683
        %1686 = vadd.xlane.f32.xlu0 %v1684
        %v1687 = vpop.xlane.xlu0 %1686
        %1688 = vadd.xlane.f32.xlu0 %v1685
        %v1689 = vpop.xlane.xlu0 %1688
        %v1690 = vmul.f32 %v1687, %v1679
        %v1691 = vmul.f32 %v1689, %v1679
        %v1692 = vadd.f32 %v1690, 1e-05
        %v1693 = vadd.f32 %v1691, 1e-05
        %v1694 = vrsqrt.pop %v1692
        %v1695 = vrsqrt.pop %v1693
        %v1696 = vmul.f32 %v1682, %v1694
        %v1697 = vmul.f32 %v1683, %v1695
        %v1698 = vld [vmem:[#allocation9] sm:$0x1]
        %v1699 = vlaneseq
        %v1700 = vshrl.u32 %v1699, 7
        %v1701 = vsub.s32 0, %v1700
        %v1702 = vrot.slane %v1698, %v1701
        %v1703 = vmul.f32 %v1696, %v1702
        %v1704 = vmul.f32 %v1697, %v1702
        %v1705 = vld [vmem:[#allocation9 + $0x1] sm:$0x1]
        %v1706 = vlaneseq
        %v1707 = vshrl.u32 %v1706, 7
        %v1708 = vsub.s32 0, %v1707
        %v1709 = vrot.slane %v1705, %v1708
        %v1710 = vadd.f32 %v1703, %v1709
        %v1711 = vadd.f32 %v1704, %v1709
        %v1712 = vpack.c.bf16 %v1711, %v1710
        %vm1713 = vcmp.ge.s32.totalorder %v555, 4
        %vm1714 = vcmp.ge.s32.totalorder %v556, 4
        %v1715 = vsel %vm1713, 1, 0
        %v1716 = vsel %vm1714, 1, 0
        %v1717 = vcvt.s32.f32 %v1715
        %v1718 = vcvt.s32.f32 %v1716
        %v1719 = vrot.slane %v669, 4
        %v1720 = vrot.slane %v672, 4
        %vm1721 = vcmp.lt.s32.totalorder %v555, 4
        %v1722 = vsel %vm1721, %v1719, %v1720
        %v1723 = vsel %vm1721, %v1720, %v1719
        %v1724 = vmul.f32 %v1723, %v1717
        %v1725 = vmul.f32 %v1722, %v1718
        %v1726 = vpack.c.bf16 %v1725, %v1724
        %v1727 = vrot.slane %v669, 7
        %v1728 = vrot.slane %v672, 7
        %v1729 = vsel %vm1077, %v1727, %v1728
        %v1730 = vsel %vm1077, %v1728, %v1727
        %v1731 = vmul.f32 %v1730, %v1071
        %v1732 = vmul.f32 %v1729, %v1072
        %v1733 = vpack.c.bf16 %v1732, %v1731
        %vm1734 = vcmp.lt.s32.totalorder %v555, 15
        %vm1735 = vcmp.lt.s32.totalorder %v556, 15
        %v1736 = vsel %vm1734, 1, 0
        %v1737 = vsel %vm1735, 1, 0
        %v1738 = vcvt.s32.f32 %v1736
        %v1739 = vcvt.s32.f32 %v1737
        %v1740 = vrot.slane %v669, 1
        %v1741 = vrot.slane %v672, 1
        %vm1742 = vcmp.lt.s32.totalorder %v555, 7
        %v1743 = vsel %vm1742, %v1740, %v1741
        %v1744 = vsel %vm1742, %v1741, %v1740
        %v1745 = vmul.f32 %v1743, %v1738
        %v1746 = vmul.f32 %v1744, %v1739
        %v1747 = vpack.c.bf16 %v1746, %v1745
        %vm1748 = vcmp.lt.s32.totalorder %v555, 12
        %vm1749 = vcmp.lt.s32.totalorder %v556, 12
        %v1750 = vsel %vm1748, 1, 0
        %v1751 = vsel %vm1749, 1, 0
        %v1752 = vcvt.s32.f32 %v1750
        %v1753 = vcvt.s32.f32 %v1751
        %v1754 = vmul.f32 %v1722, %v1752
        %v1755 = vmul.f32 %v1723, %v1753
        %v1756 = vpack.c.bf16 %v1755, %v1754
        %v1757 = vld [vmem:[%s11] sm:$0xf]
        %v1758 = vld [vmem:[%s11 + $0x4] sm:$0xf]
        %v1759 = vld [vmem:[%s11 + $0x8] sm:$0xf]
        %v1760 = vld [vmem:[%s11 + $0xc] sm:$0xf]
        %v1761 = vld [vmem:[%s11 + $0x10] sm:$0xf]
        %v1762 = vld [vmem:[%s11 + $0x14] sm:$0xf]
        %v1763 = vld [vmem:[%s11 + $0x18] sm:$0xf]
        %v1764 = vld [vmem:[%s11 + $0x1c] sm:$0xf]
        %v1765 = vld [vmem:[%s11 + $0x20] sm:$0xf]
        %v1766 = vld [vmem:[%s11 + $0x24] sm:$0xf]
        %v1767 = vld [vmem:[%s11 + $0x28] sm:$0xf]
        %v1768 = vld [vmem:[%s11 + $0x2c] sm:$0xf]
        %v1769 = vld [vmem:[%s11 + $0x30] sm:$0xf]
        %v1770 = vld [vmem:[%s11 + $0x34] sm:$0xf]
        %v1771 = vld [vmem:[%s11 + $0x38] sm:$0xf]
        %v1772 = vld [vmem:[%s11 + $0x3c] sm:$0xf]
        %v1773 = vld [vmem:[%s11 + $0x40] sm:$0xf]
        %v1774 = vld [vmem:[%s11 + $0x44] sm:$0xf]
        %v1775 = vld [vmem:[%s11 + $0x48] sm:$0xf]
        %v1776 = vld [vmem:[%s11 + $0x4c] sm:$0xf]
        %v1777 = vld [vmem:[%s11 + $0x50] sm:$0xf]
        %v1778 = vld [vmem:[%s11 + $0x54] sm:$0xf]
        %v1779 = vld [vmem:[%s11 + $0x58] sm:$0xf]
        %v1780 = vld [vmem:[%s11 + $0x5c] sm:$0xf]
        %v1781 = vld [vmem:[%s11 + $0x60] sm:$0xf]
        %v1782 = vld [vmem:[%s11 + $0x64] sm:$0xf]
        %v1783 = vld [vmem:[%s11 + $0x68] sm:$0xf]
        %v1784 = vld [vmem:[%s11 + $0x6c] sm:$0xf]
        %v1785 = vld [vmem:[%s11 + $0x70] sm:$0xf]
        %v1786 = vld [vmem:[%s11 + $0x74] sm:$0xf]
        %v1787 = vld [vmem:[%s11 + $0x78] sm:$0xf]
        %v1788 = vld [vmem:[%s11 + $0x7c] sm:$0xf]
        %v1789 = vld [vmem:[%s11 + $0x80] sm:$0xf]
        %v1790 = vld [vmem:[%s11 + $0x84] sm:$0xf]
        %v1791 = vld [vmem:[%s11 + $0x88] sm:$0xf]
        %v1792 = vld [vmem:[%s11 + $0x8c] sm:$0xf]
        %v1793 = vld [vmem:[%s11 + $0x90] sm:$0xf]
        %v1794 = vld [vmem:[%s11 + $0x94] sm:$0xf]
        %v1795 = vld [vmem:[%s11 + $0x98] sm:$0xf]
        %v1796 = vld [vmem:[%s11 + $0x9c] sm:$0xf]
        %v1797 = vld [vmem:[%s11 + $0xa0] sm:$0xf]
        %v1798 = vld [vmem:[%s11 + $0xa4] sm:$0xf]
        %v1799 = vld [vmem:[%s11 + $0xa8] sm:$0xf]
        %v1800 = vld [vmem:[%s11 + $0xac] sm:$0xf]
        %v1801 = vld [vmem:[%s11 + $0xb0] sm:$0xf]
        %v1802 = vld [vmem:[%s11 + $0xb4] sm:$0xf]
        %v1803 = vld [vmem:[%s11 + $0xb8] sm:$0xf]
        %v1804 = vld [vmem:[%s11 + $0xbc] sm:$0xf]
        %v1805 = vld [vmem:[%s11 + $0xc0] sm:$0xf]
        %v1806 = vld [vmem:[%s11 + $0xc4] sm:$0xf]
        %v1807 = vld [vmem:[%s11 + $0xc8] sm:$0xf]
        %v1808 = vld [vmem:[%s11 + $0xcc] sm:$0xf]
        %v1809 = vld [vmem:[%s11 + $0xd0] sm:$0xf]
        %v1810 = vld [vmem:[%s11 + $0xd4] sm:$0xf]
        %v1811 = vld [vmem:[%s11 + $0xd8] sm:$0xf]
        %v1812 = vld [vmem:[%s11 + $0xdc] sm:$0xf]
        %v1813 = vld [vmem:[%s11 + $0xe0] sm:$0xf]
        %v1814 = vld [vmem:[%s11 + $0xe4] sm:$0xf]
        %v1815 = vld [vmem:[%s11 + $0xe8] sm:$0xf]
        %v1816 = vld [vmem:[%s11 + $0xec] sm:$0xf]
        %v1817 = vld [vmem:[%s11 + $0xf0] sm:$0xf]
        %v1818 = vld [vmem:[%s11 + $0xf4] sm:$0xf]
        %v1819 = vld [vmem:[%s11 + $0xf8] sm:$0xf]
        %v1820 = vld [vmem:[%s11 + $0xfc] sm:$0xf]
        %v1821 = vld [vmem:[%s11 + $0x100] sm:$0xf]
        %v1822 = vld [vmem:[%s11 + $0x104] sm:$0xf]
        %v1823 = vld [vmem:[%s11 + $0x108] sm:$0xf]
        %v1824 = vld [vmem:[%s11 + $0x10c] sm:$0xf]
        %v1825 = vld [vmem:[%s11 + $0x110] sm:$0xf]
        %v1826 = vld [vmem:[%s11 + $0x114] sm:$0xf]
        %v1827 = vld [vmem:[%s11 + $0x118] sm:$0xf]
        %v1828 = vld [vmem:[%s11 + $0x11c] sm:$0xf]
        %v1829 = vld [vmem:[%s11 + $0x120] sm:$0xf]
        %v1830 = vld [vmem:[%s11 + $0x124] sm:$0xf]
        %v1831 = vld [vmem:[%s11 + $0x128] sm:$0xf]
        %v1832 = vld [vmem:[%s11 + $0x12c] sm:$0xf]
        %v1833 = vld [vmem:[%s11 + $0x130] sm:$0xf]
        %v1834 = vld [vmem:[%s11 + $0x134] sm:$0xf]
        %v1835 = vld [vmem:[%s11 + $0x138] sm:$0xf]
        %v1836 = vld [vmem:[%s11 + $0x13c] sm:$0xf]
        %v1837 = vld [vmem:[%s11 + $0x140] sm:$0xf]
        %v1838 = vld [vmem:[%s11 + $0x144] sm:$0xf]
        %v1839 = vld [vmem:[%s11 + $0x148] sm:$0xf]
        %v1840 = vld [vmem:[%s11 + $0x14c] sm:$0xf]
        %v1841 = vld [vmem:[%s11 + $0x150] sm:$0xf]
        %v1842 = vld [vmem:[%s11 + $0x154] sm:$0xf]
        %v1843 = vld [vmem:[%s11 + $0x158] sm:$0xf]
        %v1844 = vld [vmem:[%s11 + $0x15c] sm:$0xf]
        %v1845 = vld [vmem:[%s11 + $0x160] sm:$0xf]
        %v1846 = vld [vmem:[%s11 + $0x164] sm:$0xf]
        %v1847 = vld [vmem:[%s11 + $0x168] sm:$0xf]
        %v1848 = vld [vmem:[%s11 + $0x16c] sm:$0xf]
        %v1849 = vld [vmem:[%s11 + $0x170] sm:$0xf]
        %v1850 = vld [vmem:[%s11 + $0x174] sm:$0xf]
        %v1851 = vld [vmem:[%s11 + $0x178] sm:$0xf]
        %v1852 = vld [vmem:[%s11 + $0x17c] sm:$0xf]
        %v1949 = vunpack.c.l.b16 %v1757
        %v1950 = vunpack.c.l.b16 %v1758
        %v1951 = vunpack.c.l.b16 %v1759
        %v1952 = vunpack.c.l.b16 %v1760
        %v1953 = vunpack.c.l.b16 %v1761
        %v1954 = vunpack.c.l.b16 %v1762
        %v1955 = vunpack.c.l.b16 %v1763
        %v1956 = vunpack.c.l.b16 %v1764
        %v1957 = vunpack.c.l.b16 %v1765
        %v1958 = vunpack.c.l.b16 %v1766
        %v1959 = vunpack.c.l.b16 %v1767
        %v1960 = vunpack.c.l.b16 %v1768
        %v1961 = vunpack.c.l.b16 %v1769
        %v1962 = vunpack.c.l.b16 %v1770
        %v1963 = vunpack.c.l.b16 %v1771
        %v1964 = vunpack.c.l.b16 %v1772
        %v1965 = vunpack.c.l.b16 %v1773
        %v1966 = vunpack.c.l.b16 %v1774
        %v1967 = vunpack.c.l.b16 %v1775
        %v1968 = vunpack.c.l.b16 %v1776
        %v1969 = vunpack.c.l.b16 %v1777
        %v1970 = vunpack.c.l.b16 %v1778
        %v1971 = vunpack.c.l.b16 %v1779
        %v1972 = vunpack.c.l.b16 %v1780
        %v1973 = vunpack.c.l.b16 %v1781
        %v1974 = vunpack.c.l.b16 %v1782
        %v1975 = vunpack.c.l.b16 %v1783
        %v1976 = vunpack.c.l.b16 %v1784
        %v1977 = vunpack.c.l.b16 %v1785
        %v1978 = vunpack.c.l.b16 %v1786
        %v1979 = vunpack.c.l.b16 %v1787
        %v1980 = vunpack.c.l.b16 %v1788
        %v1981 = vunpack.c.l.b16 %v1789
        %v1982 = vunpack.c.l.b16 %v1790
        %v1983 = vunpack.c.l.b16 %v1791
        %v1984 = vunpack.c.l.b16 %v1792
        %v1985 = vunpack.c.l.b16 %v1793
        %v1986 = vunpack.c.l.b16 %v1794
        %v1987 = vunpack.c.l.b16 %v1795
        %v1988 = vunpack.c.l.b16 %v1796
        %v1989 = vunpack.c.l.b16 %v1797
        %v1990 = vunpack.c.l.b16 %v1798
        %v1991 = vunpack.c.l.b16 %v1799
        %v1992 = vunpack.c.l.b16 %v1800
        %v1993 = vunpack.c.l.b16 %v1801
        %v1994 = vunpack.c.l.b16 %v1802
        %v1995 = vunpack.c.l.b16 %v1803
        %v1996 = vunpack.c.l.b16 %v1804
        %v1997 = vunpack.c.l.b16 %v1805
        %v1998 = vunpack.c.l.b16 %v1806
        %v1999 = vunpack.c.l.b16 %v1807
        %v2000 = vunpack.c.l.b16 %v1808
        %v2001 = vunpack.c.l.b16 %v1809
        %v2002 = vunpack.c.l.b16 %v1810
        %v2003 = vunpack.c.l.b16 %v1811
        %v2004 = vunpack.c.l.b16 %v1812
        %v2005 = vunpack.c.l.b16 %v1813
        %v2006 = vunpack.c.l.b16 %v1814
        %v2007 = vunpack.c.l.b16 %v1815
        %v2008 = vunpack.c.l.b16 %v1816
        %v2009 = vunpack.c.l.b16 %v1817
        %v2010 = vunpack.c.l.b16 %v1818
        %v2011 = vunpack.c.l.b16 %v1819
        %v2012 = vunpack.c.l.b16 %v1820
        %v2013 = vunpack.c.l.b16 %v1821
        %v2014 = vunpack.c.l.b16 %v1822
        %v2015 = vunpack.c.l.b16 %v1823
        %v2016 = vunpack.c.l.b16 %v1824
        %v2017 = vunpack.c.l.b16 %v1825
        %v2018 = vunpack.c.l.b16 %v1826
        %v2019 = vunpack.c.l.b16 %v1827
        %v2020 = vunpack.c.l.b16 %v1828
        %v2021 = vunpack.c.l.b16 %v1829
        %v2022 = vunpack.c.l.b16 %v1830
        %v2023 = vunpack.c.l.b16 %v1831
        %v2024 = vunpack.c.l.b16 %v1832
        %v2025 = vunpack.c.l.b16 %v1833
        %v2026 = vunpack.c.l.b16 %v1834
        %v2027 = vunpack.c.l.b16 %v1835
        %v2028 = vunpack.c.l.b16 %v1836
        %v2029 = vunpack.c.l.b16 %v1837
        %v2030 = vunpack.c.l.b16 %v1838
        %v2031 = vunpack.c.l.b16 %v1839
        %v2032 = vunpack.c.l.b16 %v1840
        %v2033 = vunpack.c.l.b16 %v1841
        %v2034 = vunpack.c.l.b16 %v1842
        %v2035 = vunpack.c.l.b16 %v1843
        %v2036 = vunpack.c.l.b16 %v1844
        %v2037 = vunpack.c.l.b16 %v1845
        %v2038 = vunpack.c.l.b16 %v1846
        %v2039 = vunpack.c.l.b16 %v1847
        %v2040 = vunpack.c.l.b16 %v1848
        %v2041 = vunpack.c.l.b16 %v1849
        %v2042 = vunpack.c.l.b16 %v1850
        %v2043 = vunpack.c.l.b16 %v1851
        %v2044 = vunpack.c.l.b16 %v1852
        %v2045 = vpack.c.b16 %v1950, %v1949
        %v2046 = vpack.c.b16 %v1952, %v1951
        %v2047 = vpack.c.b16 %v1954, %v1953
        %v2048 = vpack.c.b16 %v1956, %v1955
        %v2049 = vpack.c.b16 %v1958, %v1957
        %v2050 = vpack.c.b16 %v1960, %v1959
        %v2051 = vpack.c.b16 %v1962, %v1961
        %v2052 = vpack.c.b16 %v1964, %v1963
        %v2053 = vpack.c.b16 %v1966, %v1965
        %v2054 = vpack.c.b16 %v1968, %v1967
        %v2055 = vpack.c.b16 %v1970, %v1969
        %v2056 = vpack.c.b16 %v1972, %v1971
        %v2057 = vpack.c.b16 %v1974, %v1973
        %v2058 = vpack.c.b16 %v1976, %v1975
        %v2059 = vpack.c.b16 %v1978, %v1977
        %v2060 = vpack.c.b16 %v1980, %v1979
        %v2061 = vpack.c.b16 %v1982, %v1981
        %v2062 = vpack.c.b16 %v1984, %v1983
        %v2063 = vpack.c.b16 %v1986, %v1985
        %v2064 = vpack.c.b16 %v1988, %v1987
        %v2065 = vpack.c.b16 %v1990, %v1989
        %v2066 = vpack.c.b16 %v1992, %v1991
        %v2067 = vpack.c.b16 %v1994, %v1993
        %v2068 = vpack.c.b16 %v1996, %v1995
        %v2069 = vpack.c.b16 %v1998, %v1997
        %v2070 = vpack.c.b16 %v2000, %v1999
        %v2071 = vpack.c.b16 %v2002, %v2001
        %v2072 = vpack.c.b16 %v2004, %v2003
        %v2073 = vpack.c.b16 %v2006, %v2005
        %v2074 = vpack.c.b16 %v2008, %v2007
        %v2075 = vpack.c.b16 %v2010, %v2009
        %v2076 = vpack.c.b16 %v2012, %v2011
        %v2077 = vpack.c.b16 %v2014, %v2013
        %v2078 = vpack.c.b16 %v2016, %v2015
        %v2079 = vpack.c.b16 %v2018, %v2017
        %v2080 = vpack.c.b16 %v2020, %v2019
        %v2081 = vpack.c.b16 %v2022, %v2021
        %v2082 = vpack.c.b16 %v2024, %v2023
        %v2083 = vpack.c.b16 %v2026, %v2025
        %v2084 = vpack.c.b16 %v2028, %v2027
        %v2085 = vpack.c.b16 %v2030, %v2029
        %v2086 = vpack.c.b16 %v2032, %v2031
        %v2087 = vpack.c.b16 %v2034, %v2033
        %v2088 = vpack.c.b16 %v2036, %v2035
        %v2089 = vpack.c.b16 %v2038, %v2037
        %v2090 = vpack.c.b16 %v2040, %v2039
        %v2091 = vpack.c.b16 %v2042, %v2041
        %v2092 = vpack.c.b16 %v2044, %v2043
        %2141 = vmatprep.subr.bf16.mxu0 0
        %2142 = vmatpush1.bf16.msra.mxu0 %v2045
        %2143 = vmatprep.subr.bf16.mxu0 0
        %2144 = vmatpush1.bf16.msra.mxu0 %v2046
        %2145 = vmatprep.subr.bf16.mxu0 0
        %2146 = vmatpush1.bf16.msra.mxu0 %v2047
        %2147 = vmatprep.subr.bf16.mxu0 0
        %2148 = vmatpush1.bf16.msra.mxu0 %v2048
        %2149 = vmatprep.subr.bf16.mxu0 0
        %2150 = vmatpush1.bf16.msra.mxu0 %v2049
        %2151 = vmatprep.subr.bf16.mxu0 0
        %2152 = vmatpush1.bf16.msra.mxu0 %v2050
        %2153 = vmatprep.subr.bf16.mxu0 0
        %2154 = vmatpush1.bf16.msra.mxu0 %v2051
        %2155 = vmatprep.subr.bf16.mxu0 0
        %2156 = vmatpush1.bf16.msra.mxu0 %v2052
        %2157 = vmatprep.subr.bf16.mxu0 0
        %2158 = vmatpush1.bf16.msra.mxu0 %v2053
        %2159 = vmatprep.subr.bf16.mxu0 0
        %2160 = vmatpush1.bf16.msra.mxu0 %v2054
        %2161 = vmatprep.subr.bf16.mxu0 0
        %2162 = vmatpush1.bf16.msra.mxu0 %v2055
        %2163 = vmatprep.subr.bf16.mxu0 0
        %2164 = vmatpush1.bf16.msra.mxu0 %v2056
        %2165 = vmatprep.subr.bf16.mxu0 0
        %2166 = vmatpush1.bf16.msra.mxu0 %v2057
        %2167 = vmatprep.subr.bf16.mxu0 0
        %2168 = vmatpush1.bf16.msra.mxu0 %v2058
        %2169 = vmatprep.subr.bf16.mxu0 0
        %2170 = vmatpush1.bf16.msra.mxu0 %v2059
        %2171 = vmatprep.subr.bf16.mxu0 0
        %2172 = vmatpush1.bf16.msra.mxu0 %v2060
        %2173 = vmatprep.mubr.bf16.mxu0 %v1726
        %2174 = vmatmul.mubr.bf16.gmra.mrb[0].mxu0 %v1712
        %v2175 = vpop.f32.mrb[0].mxu0
        %v2176 = vadd.f32 0.0, %v2175
        %v2177 = vpop.f32.mrb[0].mxu0
        %v2178 = vpop.f32.mrb[0].mxu0
        %v2179 = vadd.f32 0.0, %v2178
        %v2180 = vpop.f32.mrb[0].mxu0
        %2181 = vdwg.mxu0
        %2182 = vmatprep.subr.bf16.mxu0 0
        %2183 = vmatpush1.bf16.msra.mxu0 %v2061
        %2184 = vmatprep.subr.bf16.mxu0 0
        %2185 = vmatpush1.bf16.msra.mxu0 %v2062
        %2186 = vmatprep.subr.bf16.mxu0 0
        %2187 = vmatpush1.bf16.msra.mxu0 %v2063
        %2188 = vmatprep.subr.bf16.mxu0 0
        %2189 = vmatpush1.bf16.msra.mxu0 %v2064
        %2190 = vmatprep.subr.bf16.mxu0 0
        %2191 = vmatpush1.bf16.msra.mxu0 %v2065
        %2192 = vmatprep.subr.bf16.mxu0 0
        %2193 = vmatpush1.bf16.msra.mxu0 %v2066
        %2194 = vmatprep.subr.bf16.mxu0 0
        %2195 = vmatpush1.bf16.msra.mxu0 %v2067
        %2196 = vmatprep.subr.bf16.mxu0 0
        %2197 = vmatpush1.bf16.msra.mxu0 %v2068
        %2198 = vmatprep.subr.bf16.mxu0 0
        %2199 = vmatpush1.bf16.msra.mxu0 %v2069
        %2200 = vmatprep.subr.bf16.mxu0 0
        %2201 = vmatpush1.bf16.msra.mxu0 %v2070
        %2202 = vmatprep.subr.bf16.mxu0 0
        %2203 = vmatpush1.bf16.msra.mxu0 %v2071
        %2204 = vmatprep.subr.bf16.mxu0 0
        %2205 = vmatpush1.bf16.msra.mxu0 %v2072
        %2206 = vmatprep.subr.bf16.mxu0 0
        %2207 = vmatpush1.bf16.msra.mxu0 %v2073
        %2208 = vmatprep.subr.bf16.mxu0 0
        %2209 = vmatpush1.bf16.msra.mxu0 %v2074
        %2210 = vmatprep.subr.bf16.mxu0 0
        %2211 = vmatpush1.bf16.msra.mxu0 %v2075
        %2212 = vmatprep.subr.bf16.mxu0 0
        %2213 = vmatpush1.bf16.msra.mxu0 %v2076
        %2214 = vmatprep.mubr.bf16.mxu0 %v675
        %2215 = vmatmul.mubr.bf16.gmra.mrb[0].mxu0 %v1733
        %v2216 = vpop.f32.mrb[0].mxu0
        %v2217 = vadd.f32 %v2176, %v2216
        %v2218 = vpop.f32.mrb[0].mxu0
        %v2219 = vpop.f32.mrb[0].mxu0
        %v2220 = vadd.f32 %v2179, %v2219
        %v2221 = vpop.f32.mrb[0].mxu0
        %2222 = vdwg.mxu0
        %2223 = vmatprep.subr.bf16.mxu0 0
        %2224 = vmatpush1.bf16.msra.mxu0 %v2077
        %2225 = vmatprep.subr.bf16.mxu0 0
        %2226 = vmatpush1.bf16.msra.mxu0 %v2078
        %2227 = vmatprep.subr.bf16.mxu0 0
        %2228 = vmatpush1.bf16.msra.mxu0 %v2079
        %2229 = vmatprep.subr.bf16.mxu0 0
        %2230 = vmatpush1.bf16.msra.mxu0 %v2080
        %2231 = vmatprep.subr.bf16.mxu0 0
        %2232 = vmatpush1.bf16.msra.mxu0 %v2081
        %2233 = vmatprep.subr.bf16.mxu0 0
        %2234 = vmatpush1.bf16.msra.mxu0 %v2082
        %2235 = vmatprep.subr.bf16.mxu0 0
        %2236 = vmatpush1.bf16.msra.mxu0 %v2083
        %2237 = vmatprep.subr.bf16.mxu0 0
        %2238 = vmatpush1.bf16.msra.mxu0 %v2084
        %2239 = vmatprep.subr.bf16.mxu0 0
        %2240 = vmatpush1.bf16.msra.mxu0 %v2085
        %2241 = vmatprep.subr.bf16.mxu0 0
        %2242 = vmatpush1.bf16.msra.mxu0 %v2086
        %2243 = vmatprep.subr.bf16.mxu0 0
        %2244 = vmatpush1.bf16.msra.mxu0 %v2087
        %2245 = vmatprep.subr.bf16.mxu0 0
        %2246 = vmatpush1.bf16.msra.mxu0 %v2088
        %2247 = vmatprep.subr.bf16.mxu0 0
        %2248 = vmatpush1.bf16.msra.mxu0 %v2089
        %2249 = vmatprep.subr.bf16.mxu0 0
        %2250 = vmatpush1.bf16.msra.mxu0 %v2090
        %2251 = vmatprep.subr.bf16.mxu0 0
        %2252 = vmatpush1.bf16.msra.mxu0 %v2091
        %2253 = vmatprep.subr.bf16.mxu0 0
        %2254 = vmatpush1.bf16.msra.mxu0 %v2092
        %2255 = vmatprep.mubr.bf16.mxu0 %v1756
        %2256 = vmatmul.mubr.bf16.gmra.mrb[0].mxu0 %v1747
        %v2257 = vpop.f32.mrb[0].mxu0
        %v2258 = vadd.f32 %v2217, %v2257
        %v2259 = vpop.f32.mrb[0].mxu0
        %v2260 = vpop.f32.mrb[0].mxu0
        %v2261 = vadd.f32 %v2220, %v2260
        %v2262 = vpop.f32.mrb[0].mxu0
        %2263 = vdwg.mxu0
        %v2264 = vmax.f32 %v2258, 0.0
        %v2265 = vmax.f32 %v2261, 0.0
        %2266 = vadd.xlane.f32.xlu0 %v2264
        %v2267 = vpop.xlane.xlu0 %2266
        %2268 = vadd.xlane.f32.xlu0 %v2265
        %v2269 = vpop.xlane.xlu0 %2268
        %v2270 = vmul.f32 %v2267, %v1679
        %v2271 = vmul.f32 %v2269, %v1679
        %v2272 = vsub.f32 %v2264, %v2270
        %v2273 = vsub.f32 %v2265, %v2271
        %v2274 = vmul.f32 %v2272, %v2272
        %v2275 = vmul.f32 %v2273, %v2273
        %2276 = vadd.xlane.f32.xlu0 %v2274
        %v2277 = vpop.xlane.xlu0 %2276
        %2278 = vadd.xlane.f32.xlu0 %v2275
        %v2279 = vpop.xlane.xlu0 %2278
        %v2280 = vmul.f32 %v2277, %v1679
        %v2281 = vmul.f32 %v2279, %v1679
        %v2282 = vadd.f32 %v2280, 1e-05
        %v2283 = vadd.f32 %v2281, 1e-05
        %v2284 = vrsqrt.pop %v2282
        %v2285 = vrsqrt.pop %v2283
        %v2286 = vmul.f32 %v2272, %v2284
        %v2287 = vmul.f32 %v2273, %v2285
        %v2288 = vld [vmem:[#allocation9 + $0x2] sm:$0x1]
        %v2289 = vlaneseq
        %v2290 = vshrl.u32 %v2289, 7
        %v2291 = vsub.s32 0, %v2290
        %v2292 = vrot.slane %v2288, %v2291
        %v2293 = vmul.f32 %v2286, %v2292
        %v2294 = vmul.f32 %v2287, %v2292
        %v2295 = vld [vmem:[#allocation9 + $0x3] sm:$0x1]
        %v2296 = vlaneseq
        %v2297 = vshrl.u32 %v2296, 7
        %v2298 = vsub.s32 0, %v2297
        %v2299 = vrot.slane %v2295, %v2298
        %v2300 = vadd.f32 %v2293, %v2299
        %v2301 = vadd.f32 %v2294, %v2299
        %v2302 = vpack.c.bf16 %v2301, %v2300
        %v2303 = vld [vmem:[%s12] sm:$0xf]
        %v2304 = vld [vmem:[%s12 + $0x4] sm:$0xf]
        %v2305 = vld [vmem:[%s12 + $0x8] sm:$0xf]
        %v2306 = vld [vmem:[%s12 + $0xc] sm:$0xf]
        %v2307 = vld [vmem:[%s12 + $0x10] sm:$0xf]
        %v2308 = vld [vmem:[%s12 + $0x14] sm:$0xf]
        %v2309 = vld [vmem:[%s12 + $0x18] sm:$0xf]
        %v2310 = vld [vmem:[%s12 + $0x1c] sm:$0xf]
        %v2311 = vld [vmem:[%s12 + $0x20] sm:$0xf]
        %v2312 = vld [vmem:[%s12 + $0x24] sm:$0xf]
        %v2313 = vld [vmem:[%s12 + $0x28] sm:$0xf]
        %v2314 = vld [vmem:[%s12 + $0x2c] sm:$0xf]
        %v2315 = vld [vmem:[%s12 + $0x30] sm:$0xf]
        %v2316 = vld [vmem:[%s12 + $0x34] sm:$0xf]
        %v2317 = vld [vmem:[%s12 + $0x38] sm:$0xf]
        %v2318 = vld [vmem:[%s12 + $0x3c] sm:$0xf]
        %v2335 = vunpack.c.l.b16 %v2303
        %v2336 = vunpack.c.l.b16 %v2304
        %v2337 = vunpack.c.l.b16 %v2305
        %v2338 = vunpack.c.l.b16 %v2306
        %v2339 = vunpack.c.l.b16 %v2307
        %v2340 = vunpack.c.l.b16 %v2308
        %v2341 = vunpack.c.l.b16 %v2309
        %v2342 = vunpack.c.l.b16 %v2310
        %v2343 = vunpack.c.l.b16 %v2311
        %v2344 = vunpack.c.l.b16 %v2312
        %v2345 = vunpack.c.l.b16 %v2313
        %v2346 = vunpack.c.l.b16 %v2314
        %v2347 = vunpack.c.l.b16 %v2315
        %v2348 = vunpack.c.l.b16 %v2316
        %v2349 = vunpack.c.l.b16 %v2317
        %v2350 = vunpack.c.l.b16 %v2318
        %v2351 = vpack.c.b16 %v2336, %v2335
        %v2352 = vpack.c.b16 %v2338, %v2337
        %v2353 = vpack.c.b16 %v2340, %v2339
        %v2354 = vpack.c.b16 %v2342, %v2341
        %v2355 = vpack.c.b16 %v2344, %v2343
        %v2356 = vpack.c.b16 %v2346, %v2345
        %v2357 = vpack.c.b16 %v2348, %v2347
        %v2358 = vpack.c.b16 %v2350, %v2349
        %2367 = vmatprep.subr.bf16.mxu0 0
        %2368 = vmatpush1.bf16.msra.mxu0 %v2351
        %2369 = vmatprep.subr.bf16.mxu0 0
        %2370 = vmatpush1.bf16.msra.mxu0 %v2352
        %2371 = vmatprep.subr.bf16.mxu0 0
        %2372 = vmatpush1.bf16.msra.mxu0 %v2353
        %2373 = vmatprep.subr.bf16.mxu0 0
        %2374 = vmatpush1.bf16.msra.mxu0 %v2354
        %2375 = vmatprep.subr.bf16.mxu0 0
        %2376 = vmatpush1.bf16.msra.mxu0 %v2355
        %2377 = vmatprep.subr.bf16.mxu0 0
        %2378 = vmatpush1.bf16.msra.mxu0 %v2356
        %2379 = vmatprep.subr.bf16.mxu0 0
        %2380 = vmatpush1.bf16.msra.mxu0 %v2357
        %2381 = vmatprep.subr.bf16.mxu0 0
        %2382 = vmatpush1.bf16.msra.mxu0 %v2358
        %2383 = vmatprep.subr.bf16.mxu0 0
        %2384 = vmatpush1.bf16.msra.mxu0 0
        %2385 = vmatprep.subr.bf16.mxu0 0
        %2386 = vmatpush1.bf16.msra.mxu0 0
        %2387 = vmatprep.subr.bf16.mxu0 0
        %2388 = vmatpush1.bf16.msra.mxu0 0
        %2389 = vmatprep.subr.bf16.mxu0 0
        %2390 = vmatpush1.bf16.msra.mxu0 0
        %2391 = vmatprep.subr.bf16.mxu0 0
        %2392 = vmatpush1.bf16.msra.mxu0 0
        %2393 = vmatprep.subr.bf16.mxu0 0
        %2394 = vmatpush1.bf16.msra.mxu0 0
        %2395 = vmatprep.subr.bf16.mxu0 0
        %2396 = vmatpush1.bf16.msra.mxu0 0
        %2397 = vmatprep.subr.bf16.mxu0 0
        %2398 = vmatpush1.bf16.msra.mxu0 0
        %2399 = vmatprep.mubr.bf16.mxu0 0
        %2400 = vmatmul.mubr.bf16.gmra.mrb[0].mxu0 %v2302
        %v2401 = vpop.f32.mrb[0].mxu0
        %v2402 = vadd.f32 0.0, %v2401
        %v2403 = vpop.f32.mrb[0].mxu0
        %v2404 = vpop.f32.mrb[0].mxu0
        %v2405 = vadd.f32 0.0, %v2404
        %v2406 = vpop.f32.mrb[0].mxu0
        %2407 = vdwg.mxu0
        %v2408 = vmax.f32 %v2402, 0.0
        %v2409 = vmax.f32 %v2405, 0.0
        %v2410 = vpack.c.bf16 %v2409, %v2408
        %v2411 = vld [vmem:[%s13] sm:$0xf]
        %v2412 = vld [vmem:[%s13 + $0x4] sm:$0xf]
        %v2413 = vld [vmem:[%s13 + $0x8] sm:$0xf]
        %v2414 = vld [vmem:[%s13 + $0xc] sm:$0xf]
        %v2415 = vld [vmem:[%s13 + $0x10] sm:$0xf]
        %v2416 = vld [vmem:[%s13 + $0x14] sm:$0xf]
        %v2417 = vld [vmem:[%s13 + $0x18] sm:$0xf]
        %v2418 = vld [vmem:[%s13 + $0x1c] sm:$0xf]
        %v2427 = vunpack.c.l.b16 %v2411
        %v2428 = vunpack.c.l.b16 %v2412
        %v2429 = vunpack.c.l.b16 %v2413
        %v2430 = vunpack.c.l.b16 %v2414
        %v2431 = vunpack.c.l.b16 %v2415
        %v2432 = vunpack.c.l.b16 %v2416
        %v2433 = vunpack.c.l.b16 %v2417
        %v2434 = vunpack.c.l.b16 %v2418
        %v2435 = vpack.c.b16 %v2428, %v2427
        %v2436 = vpack.c.b16 %v2430, %v2429
        %v2437 = vpack.c.b16 %v2432, %v2431
        %v2438 = vpack.c.b16 %v2434, %v2433
        %v2444 = vsel %vm1425, %v2410, 0
        %2446 = vmatprep.subr.bf16.mxu0 0
        %2447 = vmatpush1.bf16.msra.mxu0 %v2435
        %2448 = vmatprep.subr.bf16.mxu0 0
        %2449 = vmatpush1.bf16.msra.mxu0 %v2436
        %2450 = vmatprep.subr.bf16.mxu0 0
        %2451 = vmatpush1.bf16.msra.mxu0 %v2437
        %2452 = vmatprep.subr.bf16.mxu0 0
        %2453 = vmatpush1.bf16.msra.mxu0 %v2438
        %2454 = vmatprep.subr.bf16.mxu0 0
        %2455 = vmatpush1.bf16.msra.mxu0 0
        %2456 = vmatprep.subr.bf16.mxu0 0
        %2457 = vmatpush1.bf16.msra.mxu0 0
        %2458 = vmatprep.subr.bf16.mxu0 0
        %2459 = vmatpush1.bf16.msra.mxu0 0
        %2460 = vmatprep.subr.bf16.mxu0 0
        %2461 = vmatpush1.bf16.msra.mxu0 0
        %2462 = vmatprep.subr.bf16.mxu0 0
        %2463 = vmatpush1.bf16.msra.mxu0 0
        %2464 = vmatprep.subr.bf16.mxu0 0
        %2465 = vmatpush1.bf16.msra.mxu0 0
        %2466 = vmatprep.subr.bf16.mxu0 0
        %2467 = vmatpush1.bf16.msra.mxu0 0
        %2468 = vmatprep.subr.bf16.mxu0 0
        %2469 = vmatpush1.bf16.msra.mxu0 0
        %2470 = vmatprep.subr.bf16.mxu0 0
        %2471 = vmatpush1.bf16.msra.mxu0 0
        %2472 = vmatprep.subr.bf16.mxu0 0
        %2473 = vmatpush1.bf16.msra.mxu0 0
        %2474 = vmatprep.subr.bf16.mxu0 0
        %2475 = vmatpush1.bf16.msra.mxu0 0
        %2476 = vmatprep.subr.bf16.mxu0 0
        %2477 = vmatpush1.bf16.msra.mxu0 0
        %2478 = vmatprep.mubr.bf16.mxu0 0
        %2479 = vmatmul.mubr.bf16.gmra.mrb[0].mxu0 %v2444
        %v2480 = vpop.f32.mrb[0].mxu0
        %v2481 = vadd.f32 0.0, %v2480
        %v2482 = vpop.f32.mrb[0].mxu0
        %v2483 = vpop.f32.mrb[0].mxu0
        %v2484 = vadd.f32 0.0, %v2483
        %v2485 = vpop.f32.mrb[0].mxu0
        %2486 = vdwg.mxu0
        %v2487 = vmax.f32 %v2481, 0.0
        %v2488 = vmax.f32 %v2484, 0.0
        %v2489 = vand.u32 2147483647, %v2481
        %v2490 = vand.u32 2147483647, %v2484
        %v2491 = vsub.f32 0.0, %v2489
        %v2492 = vsub.f32 0.0, %v2490
        %v2493 = vmul.f32 %v2491, 1.442695
        %v2494 = vpow.pop %v2493
        %v2495 = vmul.f32 %v2492, 1.442695
        %v2496 = vpow.pop %v2495
        %v2497 = vadd.f32 %v2494, 1.0
        %v2498 = vlog2.pop %v2497
        %v2499 = vmul.f32 %v2498, 0.6931472
        %v2500 = vmul.f32 -0.5, %v2494
        %v2501 = vadd.f32 %v2500, 1.0
        %v2502 = vmul.f32 %v2501, %v2494
        %v2503 = vand.u32 2147483647, %v2494
        %vm2504 = vcmp.lt.f32.partialorder %v2503, 0.0004427343
        %v2505 = vsel %vm2504, %v2502, %v2499
        %v2506 = vadd.f32 %v2496, 1.0
        %v2507 = vlog2.pop %v2506
        %v2508 = vmul.f32 %v2507, 0.6931472
        %v2509 = vmul.f32 -0.5, %v2496
        %v2510 = vadd.f32 %v2509, 1.0
        %v2511 = vmul.f32 %v2510, %v2496
        %v2512 = vand.u32 2147483647, %v2496
        %vm2513 = vcmp.lt.f32.partialorder %v2512, 0.0004427343
        %v2514 = vsel %vm2513, %v2511, %v2508
        %v2515 = vadd.f32 %v2487, %v2505
        %v2516 = vadd.f32 %v2488, %v2514
        %v2517 = vxor.u32 %v2481, 2147483648
        %v2518 = vxor.u32 %v2484, 2147483648
        %v2519 = vmul.f32 %v2517, 1.442695
        %v2520 = vpow.pop %v2519
        %v2521 = vmul.f32 %v2518, 1.442695
        %v2522 = vpow.pop %v2521
        %v2523 = vadd.f32 %v2520, 1.0
        %v2524 = vadd.f32 %v2522, 1.0
        %v2525 = vrcp.pop %v2523
        %v2526 = vmul.f32 1.0, %v2525
        %v2527 = vrcp.pop %v2524
        %v2528 = vmul.f32 1.0, %v2527
        %v2529 = vlaneseq
        %v2530 = vand.u32 %v2529, 127
        %vm2531 = vcmp.eq.s32.totalorder %v2530, 0
        %v2532 = vsel %vm2531, %v2515, %v2526
        %v2533 = vsel %vm2531, %v2516, %v2528
        %vm2534 = vcmask 15360
        %2535 = vst.msk [vmem:[%s552] sm:$0xff] %vm2534, %v2532
        %2536 = vst.msk [vmem:[%s552 + $0x8] sm:$0xff] %vm2534, %v2533
        %p2537 = scmp.lt.s32.totalorder %s28, 1
        %s2538 = scalar_select %p2537, %s28, 1
        %s2539 = smul.addr %s2538, 2
        %s2540 = smul.addr %s2539, 8
        %s2541 = scalar_lea.vmem %s14, %s2540
        // Predicated region
        $region97: #{_forward_jit.1} parent=75 // pred_check
          %p2542 = pneg %p350
        $region98: #{_forward_jit.1} parent=75 // pred_check_branch
          %2544 = sbr.rel (%p2542) target = $region100
        $region99: #{_forward_jit.1} parent=75 // pred_region
          _
        $region100: #{_forward_jit.1} parent=75 // pred_fallthru
          _
      $region76: #{_forward_jit.1} parent=5 // pred_fallthru
        _
      %p2545 = scmp.le.s32.totalorder 2, %s23
      // Predicated region
      $region101: #{_forward_jit.1} parent=5 // pred_check
        %p2546 = pneg %p2545
      $region102: #{_forward_jit.1} parent=5 // pred_check_branch
        %2548 = sbr.rel (%p2546) target = $region104
      $region103: #{_forward_jit.1} parent=5 // pred_region
        %s2549 = ssub.s32 %s23, 2
        // Predicated region
        $region105: #{_forward_jit.1} parent=103 // pred_check
          %p2550 = pneg %p356
        $region106: #{_forward_jit.1} parent=103 // pred_check_branch
          %2552 = sbr.rel (%p2550) target = $region108
        $region107: #{_forward_jit.1} parent=103 // pred_region
          %p2553 = scmp.lt.s32.totalorder %s29, 1
          %s2554 = scalar_select %p2553, %s29, 1
          %s2555 = smul.addr %s2554, 2
          %s2556 = smul.addr %s2555, 8
          %s2557 = scalar_lea.vmem %s14, %s2556
        $region108: #{_forward_jit.1} parent=103 // pred_fallthru
          _
      $region104: #{_forward_jit.1} parent=5 // pred_fallthru
        _
    $region6: #{_forward_jit.1} parent=1 // loop_footer
      %s27 = sadd.s32 1, %s23
    $region7: #{_forward_jit.1} parent=1 // loop_footer_branch
      %22 = sbr.rel target = $region3
    $region8: #{_forward_jit.1} parent=1 // loop_exit
      _
    %2558 = vsyncpa [#allocation3], 1
    %s2559 = scalar_lea.sflag [#allocation3], 1
    %2560 = vsyncpa %s2559, 1
    %2561 = vsyncpa [#allocation5], 1
    %2562 = vsyncpa [#allocation8], 1

</llo_original>
